<compile_context>
chip_gen: v6e
topology: v6e:2x2x1
jax: 0.10.0
libtpu: 0.0.40
codegen_flags: <defaults>
</compile_context>

<pallas_src>
import functools
import math

import jax
import jax.numpy as jnp
from jax.experimental import pallas as pl
from jax.experimental.pallas import tpu as pltpu


def attention_kernel(q_ref, k_ref, v_ref, mask_ref,
                     wq_ref, bq_ref, wk_ref, bk_ref, wv_ref, bv_ref,
                     wo_ref, bo_ref, gamma_ref, beta_ref,
                     out_ref, kproj_ref, vproj_ref,
                     *, num_heads, head_size, eps):
    TQ = q_ref.shape[0]

    # K / V projections: computed once per batch element (first query tile)
    # and cached in VMEM scratch; reused by every query tile of this batch.
    @pl.when(pl.program_id(1) == 0)
    def _():
        kproj_ref[...] = (jnp.dot(k_ref[...], wk_ref[...],
                                  preferred_element_type=jnp.float32)
                          + bk_ref[...])
        vproj_ref[...] = (jnp.dot(v_ref[...], wv_ref[...],
                                  preferred_element_type=jnp.float32)
                          + bv_ref[...])

    q_in = q_ref[...].astype(jnp.float32)                     # (TQ, H) residual
    # Q projection; 1/sqrt(head_size) is pre-folded into wq/bq in the wrapper.
    mixed_q = jnp.dot(q_in, wq_ref[...],
                      preferred_element_type=jnp.float32) + bq_ref[...]

    add_mask = mask_ref[...]                                   # (1, S) additive
    kproj = kproj_ref[...]                                     # (S, H)
    vproj = vproj_ref[...]                                     # (S, H)

    # Accumulate each head's context directly into the output projection.
    acc = jnp.zeros((TQ, wo_ref.shape[1]), jnp.float32)
    for h in range(num_heads):
        lo = h * head_size
        hi = lo + head_size
        qh = mixed_q[:, lo:hi]                                 # (TQ, d), scaled
        kh = kproj[:, lo:hi]                                   # (S, d)
        vh = vproj[:, lo:hi]                                   # (S, d)

        # Contract the last axis of both operands (no kh.T materialized).
        scores = jax.lax.dot_general(
            qh, kh, (((1,), (1,)), ((), ())),
            preferred_element_type=jnp.float32)                # (TQ, S)
        scores = scores + add_mask
        m = jnp.max(scores, axis=-1, keepdims=True)
        p = jnp.exp(scores - m)
        l = jnp.sum(p, axis=-1, keepdims=True)
        probs = p * pl.reciprocal(l, approx=True)
        # TODO(synk): attention_probs dropout + head_mask omitted
        #             (eval-mode semantics, head_mask=None).
        ctx_h = jnp.dot(probs, vh, preferred_element_type=jnp.float32)
        acc = acc + jnp.dot(ctx_h, wo_ref[lo:hi, :],
                            preferred_element_type=jnp.float32)

    # SelfOutput: output bias + residual + LayerNorm.
    x = acc + bo_ref[...] + q_in
    u = jnp.mean(x, axis=-1, keepdims=True)
    xc = x - u
    s = jnp.mean(xc * xc, axis=-1, keepdims=True)
    xn = xc * jax.lax.rsqrt(s + eps)
    out_ref[...] = (gamma_ref[...] * xn + beta_ref[...]).astype(out_ref.dtype)


def attention_forward(q, k, v, attention_mask, params, *, num_heads, eps=1e-12):
    B, S, H = q.shape
    head_size = H // num_heads
    inv_sqrt_d = 1.0 / math.sqrt(head_size)

    # Fold the 1/sqrt(d) attention scale into the query projection.
    wq = params["wq"] * inv_sqrt_d
    bq = params["bq"] * inv_sqrt_d

    # Precompute the additive key mask in the wrapper (zero in-kernel cost).
    add_mask = ((1.0 - attention_mask.astype(jnp.float32)) * -10000.0
                ).reshape(B, 1, S)

    # Query-tile size: largest "nice" tile that divides S (caps the (TQ, S)
    # score slabs in VMEM and keeps output stores lane-dense); fall back to
    # full sequence for small / odd S.
    TQ = S
    for cand in (512, 256, 128):
        if S % cand == 0:
            TQ = cand
            break
    nqt = S // TQ

    q_spec = pl.BlockSpec((None, TQ, H), lambda b, t: (b, t, 0))
    kv_spec = pl.BlockSpec((None, S, H), lambda b, t: (b, 0, 0))
    mask_spec = pl.BlockSpec((None, 1, S), lambda b, t: (b, 0, 0))
    w_spec = pl.BlockSpec((H, H), lambda b, t: (0, 0))
    vec_spec = pl.BlockSpec((1, H), lambda b, t: (0, 0))
    out_spec = pl.BlockSpec((None, TQ, H), lambda b, t: (b, t, 0))

    kernel = functools.partial(attention_kernel, num_heads=num_heads,
                               head_size=head_size, eps=eps)

    return pl.pallas_call(
        kernel,
        out_shape=jax.ShapeDtypeStruct((B, S, H), q.dtype),
        grid_spec=pltpu.PrefetchScalarGridSpec(
            num_scalar_prefetch=0,
            grid=(B, nqt),
            in_specs=[q_spec, kv_spec, kv_spec, mask_spec,
                      w_spec, vec_spec,    # query proj (pre-scaled)
                      w_spec, vec_spec,    # key proj
                      w_spec, vec_spec,    # value proj
                      w_spec, vec_spec,    # output dense
                      vec_spec, vec_spec],  # layernorm gamma / beta
            out_specs=out_spec,
            scratch_shapes=[pltpu.VMEM((S, H), jnp.float32),   # cached K proj
                            pltpu.VMEM((S, H), jnp.float32)],  # cached V proj
        ),
        compiler_params=pltpu.CompilerParams(
            # B is independent (megacore-shardable).  The query-tile axis is
            # "arbitrary" because the K/V projection scratch is carried
            # across it (init at program_id(1)==0, reuse afterwards).
            dimension_semantics=("parallel", "arbitrary"),
            vmem_limit_bytes=64 * 1024 * 1024),
    )(q, k, v, add_mask,
      wq, bq, params["wk"], params["bk"],
      params["wv"], params["bv"], params["wo"], params["bo"],
      params["gamma"], params["beta"])


def reference_forward(q, k, v, attention_mask, params, *, num_heads, eps=1e-12):
    """Pure-JAX reference mirroring the PyTorch forward (eval mode)."""
    B, S, H = q.shape
    d = H // num_heads
    add_mask = (1.0 - attention_mask.astype(q.dtype))[:, None, None, :] * -10000.0

    def proj(x, w, b):
        return x @ w + b[0]

    def split(x):
        return x.reshape(B, S, num_heads, d).transpose(0, 2, 1, 3)

    ql = split(proj(q, params["wq"], params["bq"]))
    kl = split(proj(k, params["wk"], params["bk"]))
    vl = split(proj(v, params["wv"], params["bv"]))

    scores = jnp.einsum("bhqd,bhkd->bhqk", ql, kl) / math.sqrt(d) + add_mask
    probs = jax.nn.softmax(scores, axis=-1)
    ctx = jnp.einsum("bhqk,bhkd->bhqd", probs, vl).transpose(0, 2, 1, 3).reshape(B, S, H)

    dense = ctx @ params["wo"] + params["bo"][0]
    x = dense + q
    u = jnp.mean(x, -1, keepdims=True)
    s = jnp.mean((x - u) ** 2, -1, keepdims=True)
    xn = (x - u) / jnp.sqrt(s + eps)
    return params["gamma"][0] * xn + params["beta"][0]


if __name__ == "__main__":
    B, S, H, NH = 2, 8, 32, 4

    key = jax.random.PRNGKey(0)
    ks = jax.random.split(key, 12)
    scale = 0.05
    params = {
        "wq": scale * jax.random.normal(ks[0], (H, H), jnp.float32),
        "bq": scale * jax.random.normal(ks[1], (1, H), jnp.float32),
        "wk": scale * jax.random.normal(ks[2], (H, H), jnp.float32),
        "bk": scale * jax.random.normal(ks[3], (1, H), jnp.float32),
        "wv": scale * jax.random.normal(ks[4], (H, H), jnp.float32),
        "bv": scale * jax.random.normal(ks[5], (1, H), jnp.float32),
        "wo": scale * jax.random.normal(ks[6], (H, H), jnp.float32),
        "bo": scale * jax.random.normal(ks[7], (1, H), jnp.float32),
        "gamma": jnp.ones((1, H), jnp.float32),
        "beta": jnp.zeros((1, H), jnp.float32),
    }

    q = jax.random.normal(ks[8], (B, S, H), jnp.float32)
    k = jax.random.normal(ks[9], (B, S, H), jnp.float32)
    v = jax.random.normal(ks[10], (B, S, H), jnp.float32)
    # mask: 1 = attend, 0 = masked (last two key positions of batch 1 masked)
    attention_mask = jnp.ones((B, S), jnp.float32).at[1, -2:].set(0.0)

    out = attention_forward(q, k, v, attention_mask, params, num_heads=NH)
    out = jax.block_until_ready(out)

    ref = reference_forward(q, k, v, attention_mask, params, num_heads=NH)
    # slightly relaxed tolerance: softmax denominator uses the EUP approximate
    # reciprocal (pl.reciprocal(approx=True)).
    assert jnp.allclose(out, ref, atol=2e-3, rtol=2e-3), "mismatch vs reference"

    print("KERNEL_OK")
</pallas_src>

<mosaic_0001>
module attributes {stable_mosaic.version = 11 : i64} {
  func.func @attention_kernel(%arg0: i32, %arg1: i32, %arg2: memref<1x8x32xf32, #tpu.memory_space<vmem>>, %arg3: memref<1x8x32xf32, #tpu.memory_space<vmem>>, %arg4: memref<1x8x32xf32, #tpu.memory_space<vmem>>, %arg5: memref<1x1x8xf32, #tpu.memory_space<vmem>>, %arg6: memref<32x32xf32, #tpu.memory_space<vmem>>, %arg7: memref<1x32xf32, #tpu.memory_space<vmem>>, %arg8: memref<32x32xf32, #tpu.memory_space<vmem>>, %arg9: memref<1x32xf32, #tpu.memory_space<vmem>>, %arg10: memref<32x32xf32, #tpu.memory_space<vmem>>, %arg11: memref<1x32xf32, #tpu.memory_space<vmem>>, %arg12: memref<32x32xf32, #tpu.memory_space<vmem>>, %arg13: memref<1x32xf32, #tpu.memory_space<vmem>>, %arg14: memref<1x32xf32, #tpu.memory_space<vmem>>, %arg15: memref<1x32xf32, #tpu.memory_space<vmem>>, %arg16: memref<1x8x32xf32, #tpu.memory_space<vmem>>, %arg17: memref<8x32xf32, #tpu.memory_space<vmem>>, %arg18: memref<8x32xf32, #tpu.memory_space<vmem>>) attributes {dimension_semantics = [#tpu.dimension_semantics<parallel>, #tpu.dimension_semantics<arbitrary>], iteration_bounds = array<i64: 2, 1>, scalar_prefetch = 0 : i64, scratch_operands = 2 : i64, tpu.core_type = #tpu.core_type<tc>, window_params = [{transform_indices = @transform_0, window_bounds = array<i64: 1, 8, 32>}, {transform_indices = @transform_1, window_bounds = array<i64: 1, 8, 32>}, {transform_indices = @transform_2, window_bounds = array<i64: 1, 8, 32>}, {transform_indices = @transform_3, window_bounds = array<i64: 1, 1, 8>}, {pipeline_mode = #tpu.pipeline_mode<synchronous>, transform_indices = @transform_4, window_bounds = array<i64: 32, 32>}, {pipeline_mode = #tpu.pipeline_mode<synchronous>, transform_indices = @transform_5, window_bounds = array<i64: 1, 32>}, {pipeline_mode = #tpu.pipeline_mode<synchronous>, transform_indices = @transform_6, window_bounds = array<i64: 32, 32>}, {pipeline_mode = #tpu.pipeline_mode<synchronous>, transform_indices = @transform_7, window_bounds = array<i64: 1, 32>}, {pipeline_mode = #tpu.pipeline_mode<synchronous>, transform_indices = @transform_8, window_bounds = array<i64: 32, 32>}, {pipeline_mode = #tpu.pipeline_mode<synchronous>, transform_indices = @transform_9, window_bounds = array<i64: 1, 32>}, {pipeline_mode = #tpu.pipeline_mode<synchronous>, transform_indices = @transform_10, window_bounds = array<i64: 32, 32>}, {pipeline_mode = #tpu.pipeline_mode<synchronous>, transform_indices = @transform_11, window_bounds = array<i64: 1, 32>}, {pipeline_mode = #tpu.pipeline_mode<synchronous>, transform_indices = @transform_12, window_bounds = array<i64: 1, 32>}, {pipeline_mode = #tpu.pipeline_mode<synchronous>, transform_indices = @transform_13, window_bounds = array<i64: 1, 32>}, {transform_indices = @transform_14, window_bounds = array<i64: 1, 8, 32>}]} {
    %c0_i32 = arith.constant 0 : i32
    %0 = arith.cmpi eq, %arg1, %c0_i32 : i32
    %1 = arith.extui %0 : i1 to i32
    %c0_i32_0 = arith.constant 0 : i32
    %2 = arith.cmpi ne, %1, %c0_i32_0 : i32
    scf.if %2 {
      %c0_54 = arith.constant 0 : index
      %c0_55 = arith.constant 0 : index
      %c0_56 = arith.constant 0 : index
      %124 = vector.load %arg3[%c0_54, %c0_55, %c0_56] : memref<1x8x32xf32, #tpu.memory_space<vmem>>, vector<1x8x32xf32>
      %125 = vector.shape_cast %124 : vector<1x8x32xf32> to vector<8x32xf32>
      %c0_57 = arith.constant 0 : index
      %c0_58 = arith.constant 0 : index
      %126 = vector.load %arg8[%c0_57, %c0_58] : memref<32x32xf32, #tpu.memory_space<vmem>>, vector<32x32xf32>
      %cst_59 = arith.constant dense<0.000000e+00> : vector<8x32xf32>
      %127 = tpu.matmul %125, %126, %cst_59 {dimension_numbers = #tpu.dot_dimension_numbers<[1], [0], [0], [1], [0, 0, 1, 1], [], []>} : vector<8x32xf32>, vector<32x32xf32>, vector<8x32xf32> -> vector<8x32xf32>
      %c0_60 = arith.constant 0 : index
      %c0_61 = arith.constant 0 : index
      %128 = vector.load %arg9[%c0_60, %c0_61] : memref<1x32xf32, #tpu.memory_space<vmem>>, vector<1x32xf32>
      %129 = vector.broadcast %128 : vector<1x32xf32> to vector<8x32xf32>
      %130 = arith.addf %127, %129 : vector<8x32xf32>
      %c0_62 = arith.constant 0 : index
      %c0_63 = arith.constant 0 : index
      %131 = vector.load %arg17[%c0_62, %c0_63] : memref<8x32xf32, #tpu.memory_space<vmem>>, vector<8x32xf32>
      tpu.vector_store %arg17[%c0_62, %c0_63], %130 {strides = array<i32>} : memref<8x32xf32, #tpu.memory_space<vmem>>, vector<8x32xf32>,
      %c0_64 = arith.constant 0 : index
      %c0_65 = arith.constant 0 : index
      %c0_66 = arith.constant 0 : index
      %132 = vector.load %arg4[%c0_64, %c0_65, %c0_66] : memref<1x8x32xf32, #tpu.memory_space<vmem>>, vector<1x8x32xf32>
      %133 = vector.shape_cast %132 : vector<1x8x32xf32> to vector<8x32xf32>
      %c0_67 = arith.constant 0 : index
      %c0_68 = arith.constant 0 : index
      %134 = vector.load %arg10[%c0_67, %c0_68] : memref<32x32xf32, #tpu.memory_space<vmem>>, vector<32x32xf32>
      %cst_69 = arith.constant dense<0.000000e+00> : vector<8x32xf32>
      %135 = tpu.matmul %133, %134, %cst_69 {dimension_numbers = #tpu.dot_dimension_numbers<[1], [0], [0], [1], [0, 0, 1, 1], [], []>} : vector<8x32xf32>, vector<32x32xf32>, vector<8x32xf32> -> vector<8x32xf32>
      %c0_70 = arith.constant 0 : index
      %c0_71 = arith.constant 0 : index
      %136 = vector.load %arg11[%c0_70, %c0_71] : memref<1x32xf32, #tpu.memory_space<vmem>>, vector<1x32xf32>
      %137 = vector.broadcast %136 : vector<1x32xf32> to vector<8x32xf32>
      %138 = arith.addf %135, %137 : vector<8x32xf32>
      %c0_72 = arith.constant 0 : index
      %c0_73 = arith.constant 0 : index
      %139 = vector.load %arg18[%c0_72, %c0_73] : memref<8x32xf32, #tpu.memory_space<vmem>>, vector<8x32xf32>
      tpu.vector_store %arg18[%c0_72, %c0_73], %138 {strides = array<i32>} : memref<8x32xf32, #tpu.memory_space<vmem>>, vector<8x32xf32>,
    } else {
    }
    %c0 = arith.constant 0 : index
    %c0_1 = arith.constant 0 : index
    %c0_2 = arith.constant 0 : index
    %3 = vector.load %arg2[%c0, %c0_1, %c0_2] : memref<1x8x32xf32, #tpu.memory_space<vmem>>, vector<1x8x32xf32>
    %4 = vector.shape_cast %3 : vector<1x8x32xf32> to vector<8x32xf32>
    %c0_3 = arith.constant 0 : index
    %c0_4 = arith.constant 0 : index
    %5 = vector.load %arg6[%c0_3, %c0_4] : memref<32x32xf32, #tpu.memory_space<vmem>>, vector<32x32xf32>
    %cst = arith.constant dense<0.000000e+00> : vector<8x32xf32>
    %6 = tpu.matmul %4, %5, %cst {dimension_numbers = #tpu.dot_dimension_numbers<[1], [0], [0], [1], [0, 0, 1, 1], [], []>} : vector<8x32xf32>, vector<32x32xf32>, vector<8x32xf32> -> vector<8x32xf32>
    %c0_5 = arith.constant 0 : index
    %c0_6 = arith.constant 0 : index
    %7 = vector.load %arg7[%c0_5, %c0_6] : memref<1x32xf32, #tpu.memory_space<vmem>>, vector<1x32xf32>
    %8 = vector.broadcast %7 : vector<1x32xf32> to vector<8x32xf32>
    %9 = arith.addf %6, %8 : vector<8x32xf32>
    %c0_7 = arith.constant 0 : index
    %c0_8 = arith.constant 0 : index
    %c0_9 = arith.constant 0 : index
    %10 = vector.load %arg5[%c0_7, %c0_8, %c0_9] : memref<1x1x8xf32, #tpu.memory_space<vmem>>, vector<1x1x8xf32>
    %11 = vector.shape_cast %10 : vector<1x1x8xf32> to vector<1x8xf32>
    %c0_10 = arith.constant 0 : index
    %c0_11 = arith.constant 0 : index
    %12 = vector.load %arg17[%c0_10, %c0_11] : memref<8x32xf32, #tpu.memory_space<vmem>>, vector<8x32xf32>
    %c0_12 = arith.constant 0 : index
    %c0_13 = arith.constant 0 : index
    %13 = vector.load %arg18[%c0_12, %c0_13] : memref<8x32xf32, #tpu.memory_space<vmem>>, vector<8x32xf32>
    %cst_14 = arith.constant 0.000000e+00 : f32
    %14 = vector.broadcast %cst_14 : f32 to vector<8x32xf32>
    %15 = vector.extract_strided_slice %9 {offsets = [0, 0], sizes = [8, 8], strides = [1, 1]} : vector<8x32xf32> to vector<8x8xf32>
    %16 = vector.extract_strided_slice %12 {offsets = [0, 0], sizes = [8, 8], strides = [1, 1]} : vector<8x32xf32> to vector<8x8xf32>
    %17 = vector.extract_strided_slice %13 {offsets = [0, 0], sizes = [8, 8], strides = [1, 1]} : vector<8x32xf32> to vector<8x8xf32>
    %cst_15 = arith.constant dense<0.000000e+00> : vector<8x8xf32>
    %18 = tpu.matmul %15, %16, %cst_15 {dimension_numbers = #tpu.dot_dimension_numbers<[1], [1], [0], [0], [0, 0, 1, 0], [], []>} : vector<8x8xf32>, vector<8x8xf32>, vector<8x8xf32> -> vector<8x8xf32>
    %19 = vector.broadcast %11 : vector<1x8xf32> to vector<8x8xf32>
    %20 = arith.addf %18, %19 : vector<8x8xf32>
    %cst_16 = arith.constant dense<0xFF800000> : vector<8xf32>
    %21 = vector.multi_reduction <maximumf>, %20, %cst_16 [1] : vector<8x8xf32> to vector<8xf32>
    %22 = vector.shape_cast %21 : vector<8xf32> to vector<8x1xf32>
    %23 = vector.broadcast %22 : vector<8x1xf32> to vector<8x8xf32>
    %24 = arith.subf %20, %23 : vector<8x8xf32>
    %25 = math.exp %24 : vector<8x8xf32>
    %cst_17 = arith.constant dense<0.000000e+00> : vector<8xf32>
    %26 = vector.multi_reduction <add>, %25, %cst_17 [1] : vector<8x8xf32> to vector<8xf32>
    %27 = vector.shape_cast %26 : vector<8xf32> to vector<8x1xf32>
    %28 = tpu.reciprocal %27 {approx = true} : vector<8x1xf32> -> vector<8x1xf32>
    %29 = vector.broadcast %28 : vector<8x1xf32> to vector<8x8xf32>
    %30 = arith.mulf %25, %29 : vector<8x8xf32>
    %cst_18 = arith.constant dense<0.000000e+00> : vector<8x8xf32>
    %31 = tpu.matmul %30, %17, %cst_18 {dimension_numbers = #tpu.dot_dimension_numbers<[1], [0], [0], [1], [0, 0, 1, 1], [], []>} : vector<8x8xf32>, vector<8x8xf32>, vector<8x8xf32> -> vector<8x8xf32>
    %c0_19 = arith.constant 0 : index
    %c0_20 = arith.constant 0 : index
    %32 = vector.load %arg12[%c0_19, %c0_20] : memref<32x32xf32, #tpu.memory_space<vmem>>, vector<8x32xf32>
    %cst_21 = arith.constant dense<0.000000e+00> : vector<8x32xf32>
    %33 = tpu.matmul %31, %32, %cst_21 {dimension_numbers = #tpu.dot_dimension_numbers<[1], [0], [0], [1], [0, 0, 1, 1], [], []>} : vector<8x8xf32>, vector<8x32xf32>, vector<8x32xf32> -> vector<8x32xf32>
    %34 = arith.addf %14, %33 : vector<8x32xf32>
    %35 = vector.extract_strided_slice %9 {offsets = [0, 8], sizes = [8, 8], strides = [1, 1]} : vector<8x32xf32> to vector<8x8xf32>
    %36 = vector.extract_strided_slice %12 {offsets = [0, 8], sizes = [8, 8], strides = [1, 1]} : vector<8x32xf32> to vector<8x8xf32>
    %37 = vector.extract_strided_slice %13 {offsets = [0, 8], sizes = [8, 8], strides = [1, 1]} : vector<8x32xf32> to vector<8x8xf32>
    %cst_22 = arith.constant dense<0.000000e+00> : vector<8x8xf32>
    %38 = tpu.matmul %35, %36, %cst_22 {dimension_numbers = #tpu.dot_dimension_numbers<[1], [1], [0], [0], [0, 0, 1, 0], [], []>} : vector<8x8xf32>, vector<8x8xf32>, vector<8x8xf32> -> vector<8x8xf32>
    %39 = vector.broadcast %11 : vector<1x8xf32> to vector<8x8xf32>
    %40 = arith.addf %38, %39 : vector<8x8xf32>
    %cst_23 = arith.constant dense<0xFF800000> : vector<8xf32>
    %41 = vector.multi_reduction <maximumf>, %40, %cst_23 [1] : vector<8x8xf32> to vector<8xf32>
    %42 = vector.shape_cast %41 : vector<8xf32> to vector<8x1xf32>
    %43 = vector.broadcast %42 : vector<8x1xf32> to vector<8x8xf32>
    %44 = arith.subf %40, %43 : vector<8x8xf32>
    %45 = math.exp %44 : vector<8x8xf32>
    %cst_24 = arith.constant dense<0.000000e+00> : vector<8xf32>
    %46 = vector.multi_reduction <add>, %45, %cst_24 [1] : vector<8x8xf32> to vector<8xf32>
    %47 = vector.shape_cast %46 : vector<8xf32> to vector<8x1xf32>
    %48 = tpu.reciprocal %47 {approx = true} : vector<8x1xf32> -> vector<8x1xf32>
    %49 = vector.broadcast %48 : vector<8x1xf32> to vector<8x8xf32>
    %50 = arith.mulf %45, %49 : vector<8x8xf32>
    %cst_25 = arith.constant dense<0.000000e+00> : vector<8x8xf32>
    %51 = tpu.matmul %50, %37, %cst_25 {dimension_numbers = #tpu.dot_dimension_numbers<[1], [0], [0], [1], [0, 0, 1, 1], [], []>} : vector<8x8xf32>, vector<8x8xf32>, vector<8x8xf32> -> vector<8x8xf32>
    %c8 = arith.constant 8 : index
    %c0_26 = arith.constant 0 : index
    %52 = vector.load %arg12[%c8, %c0_26] : memref<32x32xf32, #tpu.memory_space<vmem>>, vector<8x32xf32>
    %cst_27 = arith.constant dense<0.000000e+00> : vector<8x32xf32>
    %53 = tpu.matmul %51, %52, %cst_27 {dimension_numbers = #tpu.dot_dimension_numbers<[1], [0], [0], [1], [0, 0, 1, 1], [], []>} : vector<8x8xf32>, vector<8x32xf32>, vector<8x32xf32> -> vector<8x32xf32>
    %54 = arith.addf %34, %53 : vector<8x32xf32>
    %55 = vector.extract_strided_slice %9 {offsets = [0, 16], sizes = [8, 8], strides = [1, 1]} : vector<8x32xf32> to vector<8x8xf32>
    %56 = vector.extract_strided_slice %12 {offsets = [0, 16], sizes = [8, 8], strides = [1, 1]} : vector<8x32xf32> to vector<8x8xf32>
    %57 = vector.extract_strided_slice %13 {offsets = [0, 16], sizes = [8, 8], strides = [1, 1]} : vector<8x32xf32> to vector<8x8xf32>
    %cst_28 = arith.constant dense<0.000000e+00> : vector<8x8xf32>
    %58 = tpu.matmul %55, %56, %cst_28 {dimension_numbers = #tpu.dot_dimension_numbers<[1], [1], [0], [0], [0, 0, 1, 0], [], []>} : vector<8x8xf32>, vector<8x8xf32>, vector<8x8xf32> -> vector<8x8xf32>
    %59 = vector.broadcast %11 : vector<1x8xf32> to vector<8x8xf32>
    %60 = arith.addf %58, %59 : vector<8x8xf32>
    %cst_29 = arith.constant dense<0xFF800000> : vector<8xf32>
    %61 = vector.multi_reduction <maximumf>, %60, %cst_29 [1] : vector<8x8xf32> to vector<8xf32>
    %62 = vector.shape_cast %61 : vector<8xf32> to vector<8x1xf32>
    %63 = vector.broadcast %62 : vector<8x1xf32> to vector<8x8xf32>
    %64 = arith.subf %60, %63 : vector<8x8xf32>
    %65 = math.exp %64 : vector<8x8xf32>
    %cst_30 = arith.constant dense<0.000000e+00> : vector<8xf32>
    %66 = vector.multi_reduction <add>, %65, %cst_30 [1] : vector<8x8xf32> to vector<8xf32>
    %67 = vector.shape_cast %66 : vector<8xf32> to vector<8x1xf32>
    %68 = tpu.reciprocal %67 {approx = true} : vector<8x1xf32> -> vector<8x1xf32>
    %69 = vector.broadcast %68 : vector<8x1xf32> to vector<8x8xf32>
    %70 = arith.mulf %65, %69 : vector<8x8xf32>
    %cst_31 = arith.constant dense<0.000000e+00> : vector<8x8xf32>
    %71 = tpu.matmul %70, %57, %cst_31 {dimension_numbers = #tpu.dot_dimension_numbers<[1], [0], [0], [1], [0, 0, 1, 1], [], []>} : vector<8x8xf32>, vector<8x8xf32>, vector<8x8xf32> -> vector<8x8xf32>
    %c16 = arith.constant 16 : index
    %c0_32 = arith.constant 0 : index
    %72 = vector.load %arg12[%c16, %c0_32] : memref<32x32xf32, #tpu.memory_space<vmem>>, vector<8x32xf32>
    %cst_33 = arith.constant dense<0.000000e+00> : vector<8x32xf32>
    %73 = tpu.matmul %71, %72, %cst_33 {dimension_numbers = #tpu.dot_dimension_numbers<[1], [0], [0], [1], [0, 0, 1, 1], [], []>} : vector<8x8xf32>, vector<8x32xf32>, vector<8x32xf32> -> vector<8x32xf32>
    %74 = arith.addf %54, %73 : vector<8x32xf32>
    %75 = vector.extract_strided_slice %9 {offsets = [0, 24], sizes = [8, 8], strides = [1, 1]} : vector<8x32xf32> to vector<8x8xf32>
    %76 = vector.extract_strided_slice %12 {offsets = [0, 24], sizes = [8, 8], strides = [1, 1]} : vector<8x32xf32> to vector<8x8xf32>
    %77 = vector.extract_strided_slice %13 {offsets = [0, 24], sizes = [8, 8], strides = [1, 1]} : vector<8x32xf32> to vector<8x8xf32>
    %cst_34 = arith.constant dense<0.000000e+00> : vector<8x8xf32>
    %78 = tpu.matmul %75, %76, %cst_34 {dimension_numbers = #tpu.dot_dimension_numbers<[1], [1], [0], [0], [0, 0, 1, 0], [], []>} : vector<8x8xf32>, vector<8x8xf32>, vector<8x8xf32> -> vector<8x8xf32>
    %79 = vector.broadcast %11 : vector<1x8xf32> to vector<8x8xf32>
    %80 = arith.addf %78, %79 : vector<8x8xf32>
    %cst_35 = arith.constant dense<0xFF800000> : vector<8xf32>
    %81 = vector.multi_reduction <maximumf>, %80, %cst_35 [1] : vector<8x8xf32> to vector<8xf32>
    %82 = vector.shape_cast %81 : vector<8xf32> to vector<8x1xf32>
    %83 = vector.broadcast %82 : vector<8x1xf32> to vector<8x8xf32>
    %84 = arith.subf %80, %83 : vector<8x8xf32>
    %85 = math.exp %84 : vector<8x8xf32>
    %cst_36 = arith.constant dense<0.000000e+00> : vector<8xf32>
    %86 = vector.multi_reduction <add>, %85, %cst_36 [1] : vector<8x8xf32> to vector<8xf32>
    %87 = vector.shape_cast %86 : vector<8xf32> to vector<8x1xf32>
    %88 = tpu.reciprocal %87 {approx = true} : vector<8x1xf32> -> vector<8x1xf32>
    %89 = vector.broadcast %88 : vector<8x1xf32> to vector<8x8xf32>
    %90 = arith.mulf %85, %89 : vector<8x8xf32>
    %cst_37 = arith.constant dense<0.000000e+00> : vector<8x8xf32>
    %91 = tpu.matmul %90, %77, %cst_37 {dimension_numbers = #tpu.dot_dimension_numbers<[1], [0], [0], [1], [0, 0, 1, 1], [], []>} : vector<8x8xf32>, vector<8x8xf32>, vector<8x8xf32> -> vector<8x8xf32>
    %c24 = arith.constant 24 : index
    %c0_38 = arith.constant 0 : index
    %92 = vector.load %arg12[%c24, %c0_38] : memref<32x32xf32, #tpu.memory_space<vmem>>, vector<8x32xf32>
    %cst_39 = arith.constant dense<0.000000e+00> : vector<8x32xf32>
    %93 = tpu.matmul %91, %92, %cst_39 {dimension_numbers = #tpu.dot_dimension_numbers<[1], [0], [0], [1], [0, 0, 1, 1], [], []>} : vector<8x8xf32>, vector<8x32xf32>, vector<8x32xf32> -> vector<8x32xf32>
    %94 = arith.addf %74, %93 : vector<8x32xf32>
    %c0_40 = arith.constant 0 : index
    %c0_41 = arith.constant 0 : index
    %95 = vector.load %arg13[%c0_40, %c0_41] : memref<1x32xf32, #tpu.memory_space<vmem>>, vector<1x32xf32>
    %96 = vector.broadcast %95 : vector<1x32xf32> to vector<8x32xf32>
    %97 = arith.addf %94, %96 : vector<8x32xf32>
    %98 = arith.addf %97, %4 : vector<8x32xf32>
    %cst_42 = arith.constant dense<0.000000e+00> : vector<8xf32>
    %99 = vector.multi_reduction <add>, %98, %cst_42 [1] : vector<8x32xf32> to vector<8xf32>
    %100 = vector.shape_cast %99 : vector<8xf32> to vector<8x1xf32>
    %cst_43 = arith.constant 3.200000e+01 : f32
    %101 = vector.broadcast %cst_43 : f32 to vector<8x1xf32>
    %102 = arith.divf %100, %101 : vector<8x1xf32>
    %103 = vector.broadcast %102 : vector<8x1xf32> to vector<8x32xf32>
    %104 = arith.subf %98, %103 : vector<8x32xf32>
    %105 = arith.mulf %104, %104 : vector<8x32xf32>
    %cst_44 = arith.constant dense<0.000000e+00> : vector<8xf32>
    %106 = vector.multi_reduction <add>, %105, %cst_44 [1] : vector<8x32xf32> to vector<8xf32>
    %107 = vector.shape_cast %106 : vector<8xf32> to vector<8x1xf32>
    %cst_45 = arith.constant 3.200000e+01 : f32
    %108 = vector.broadcast %cst_45 : f32 to vector<8x1xf32>
    %109 = arith.divf %107, %108 : vector<8x1xf32>
    %cst_46 = arith.constant 9.99999996E-13 : f32
    %110 = vector.broadcast %cst_46 : f32 to vector<8x1xf32>
    %111 = arith.addf %109, %110 : vector<8x1xf32>
    %112 = math.rsqrt %111 : vector<8x1xf32>
    %113 = vector.broadcast %112 : vector<8x1xf32> to vector<8x32xf32>
    %114 = arith.mulf %104, %113 : vector<8x32xf32>
    %c0_47 = arith.constant 0 : index
    %c0_48 = arith.constant 0 : index
    %115 = vector.load %arg14[%c0_47, %c0_48] : memref<1x32xf32, #tpu.memory_space<vmem>>, vector<1x32xf32>
    %116 = vector.broadcast %115 : vector<1x32xf32> to vector<8x32xf32>
    %117 = arith.mulf %116, %114 : vector<8x32xf32>
    %c0_49 = arith.constant 0 : index
    %c0_50 = arith.constant 0 : index
    %118 = vector.load %arg15[%c0_49, %c0_50] : memref<1x32xf32, #tpu.memory_space<vmem>>, vector<1x32xf32>
    %119 = vector.broadcast %118 : vector<1x32xf32> to vector<8x32xf32>
    %120 = arith.addf %117, %119 : vector<8x32xf32>
    %c0_51 = arith.constant 0 : index
    %c0_52 = arith.constant 0 : index
    %c0_53 = arith.constant 0 : index
    %121 = vector.load %arg16[%c0_51, %c0_52, %c0_53] : memref<1x8x32xf32, #tpu.memory_space<vmem>>, vector<1x8x32xf32>
    %122 = vector.shape_cast %121 : vector<1x8x32xf32> to vector<8x32xf32>
    %123 = vector.shape_cast %120 : vector<8x32xf32> to vector<1x8x32xf32>
    tpu.vector_store %arg16[%c0_51, %c0_52, %c0_53], %123 {strides = array<i32>} : memref<1x8x32xf32, #tpu.memory_space<vmem>>, vector<1x8x32xf32>,
    return
  }
  func.func @transform_0(%arg0: i32, %arg1: i32) -> (i32, i32, i32) {
    %c0_i32 = arith.constant 0 : i32
    %c0_i32_0 = arith.constant 0 : i32
    return %arg0, %arg1, %c0_i32 : i32, i32, i32
  }
  func.func @transform_1(%arg0: i32, %arg1: i32) -> (i32, i32, i32) {
    %c0_i32 = arith.constant 0 : i32
    %c0_i32_0 = arith.constant 0 : i32
    %c0_i32_1 = arith.constant 0 : i32
    return %arg0, %c0_i32, %c0_i32_0 : i32, i32, i32
  }
  func.func @transform_2(%arg0: i32, %arg1: i32) -> (i32, i32, i32) {
    %c0_i32 = arith.constant 0 : i32
    %c0_i32_0 = arith.constant 0 : i32
    %c0_i32_1 = arith.constant 0 : i32
    return %arg0, %c0_i32, %c0_i32_0 : i32, i32, i32
  }
  func.func @transform_3(%arg0: i32, %arg1: i32) -> (i32, i32, i32) {
    %c0_i32 = arith.constant 0 : i32
    %c0_i32_0 = arith.constant 0 : i32
    %c0_i32_1 = arith.constant 0 : i32
    return %arg0, %c0_i32, %c0_i32_0 : i32, i32, i32
  }
  func.func @transform_4(%arg0: i32, %arg1: i32) -> (i32, i32) {
    %c0_i32 = arith.constant 0 : i32
    %c0_i32_0 = arith.constant 0 : i32
    %c0_i32_1 = arith.constant 0 : i32
    return %c0_i32, %c0_i32_0 : i32, i32
  }
  func.func @transform_5(%arg0: i32, %arg1: i32) -> (i32, i32) {
    %c0_i32 = arith.constant 0 : i32
    %c0_i32_0 = arith.constant 0 : i32
    %c0_i32_1 = arith.constant 0 : i32
    return %c0_i32, %c0_i32_0 : i32, i32
  }
  func.func @transform_6(%arg0: i32, %arg1: i32) -> (i32, i32) {
    %c0_i32 = arith.constant 0 : i32
    %c0_i32_0 = arith.constant 0 : i32
    %c0_i32_1 = arith.constant 0 : i32
    return %c0_i32, %c0_i32_0 : i32, i32
  }
  func.func @transform_7(%arg0: i32, %arg1: i32) -> (i32, i32) {
    %c0_i32 = arith.constant 0 : i32
    %c0_i32_0 = arith.constant 0 : i32
    %c0_i32_1 = arith.constant 0 : i32
    return %c0_i32, %c0_i32_0 : i32, i32
  }
  func.func @transform_8(%arg0: i32, %arg1: i32) -> (i32, i32) {
    %c0_i32 = arith.constant 0 : i32
    %c0_i32_0 = arith.constant 0 : i32
    %c0_i32_1 = arith.constant 0 : i32
    return %c0_i32, %c0_i32_0 : i32, i32
  }
  func.func @transform_9(%arg0: i32, %arg1: i32) -> (i32, i32) {
    %c0_i32 = arith.constant 0 : i32
    %c0_i32_0 = arith.constant 0 : i32
    %c0_i32_1 = arith.constant 0 : i32
    return %c0_i32, %c0_i32_0 : i32, i32
  }
  func.func @transform_10(%arg0: i32, %arg1: i32) -> (i32, i32) {
    %c0_i32 = arith.constant 0 : i32
    %c0_i32_0 = arith.constant 0 : i32
    %c0_i32_1 = arith.constant 0 : i32
    return %c0_i32, %c0_i32_0 : i32, i32
  }
  func.func @transform_11(%arg0: i32, %arg1: i32) -> (i32, i32) {
    %c0_i32 = arith.constant 0 : i32
    %c0_i32_0 = arith.constant 0 : i32
    %c0_i32_1 = arith.constant 0 : i32
    return %c0_i32, %c0_i32_0 : i32, i32
  }
  func.func @transform_12(%arg0: i32, %arg1: i32) -> (i32, i32) {
    %c0_i32 = arith.constant 0 : i32
    %c0_i32_0 = arith.constant 0 : i32
    %c0_i32_1 = arith.constant 0 : i32
    return %c0_i32, %c0_i32_0 : i32, i32
  }
  func.func @transform_13(%arg0: i32, %arg1: i32) -> (i32, i32) {
    %c0_i32 = arith.constant 0 : i32
    %c0_i32_0 = arith.constant 0 : i32
    %c0_i32_1 = arith.constant 0 : i32
    return %c0_i32, %c0_i32_0 : i32, i32
  }
  func.func @transform_14(%arg0: i32, %arg1: i32) -> (i32, i32, i32) {
    %c0_i32 = arith.constant 0 : i32
    %c0_i32_0 = arith.constant 0 : i32
    return %arg0, %arg1, %c0_i32 : i32, i32, i32
  }
}

</mosaic_0001>

<llo_original>
// kernel: tpu_custom_call.1
$region0: #{tpu_custom_call.1}
  #allocation0 [shape = 'u32[]', space=smem, size = 0x4, offset = 0x4, fixed_abs, tag = 'smem constant byte address 0x4 - core index']
  #allocation1 [shape = 'u32[144,128]{1,0:T(1,128)}', space=vmem, size = 0x12000, scoped, tag = 'internal scratch']
  #allocation2 [shape = 'f32[8,32]{1,0:T(8,128)}', space=vmem, size = 0x1000, scoped, tag = 'scratch operand']
  #allocation3 [shape = 'f32[8,32]{1,0:T(8,128)}', space=vmem, size = 0x1000, scoped, tag = 'scratch operand']
  %s0 = inlined_call_operand.hbm [shape: f32[2,8,32], index: 0, kind: input, shape index: {}]
  %s1 = inlined_call_operand.hbm [shape: f32[2,8,32], index: 1, kind: input, shape index: {}]
  %s2 = inlined_call_operand.hbm [shape: f32[2,8,32], index: 2, kind: input, shape index: {}]
  %s3 = inlined_call_operand.vmem [shape: f32[2,1,8], index: 3, kind: input, shape index: {}]
  %s4 = inlined_call_operand.hbm [shape: f32[32,32], index: 4, kind: input, shape index: {}]
  %s5 = inlined_call_operand.vmem [shape: f32[1,32], index: 5, kind: input, shape index: {}]
  %s6 = inlined_call_operand.hbm [shape: f32[32,32], index: 6, kind: input, shape index: {}]
  %s7 = inlined_call_operand.vmem [shape: f32[1,32], index: 7, kind: input, shape index: {}]
  %s8 = inlined_call_operand.hbm [shape: f32[32,32], index: 8, kind: input, shape index: {}]
  %s9 = inlined_call_operand.vmem [shape: f32[1,32], index: 9, kind: input, shape index: {}]
  %s10 = inlined_call_operand.hbm [shape: f32[32,32], index: 10, kind: input, shape index: {}]
  %s11 = inlined_call_operand.vmem [shape: f32[1,32], index: 11, kind: input, shape index: {}]
  %s12 = inlined_call_operand.vmem [shape: f32[1,32], index: 12, kind: input, shape index: {}]
  %s13 = inlined_call_operand.vmem [shape: f32[1,32], index: 13, kind: input, shape index: {}]
  %s14 = inlined_call_operand.hbm [shape: f32[2,8,32], index: 14, kind: output, shape index: {}]
  %s15 = sld [smem:[#allocation0]]
  $region121: #{tpu_custom_call.1} parent=0
    _
  %s17 = ssub.s32 1, %s15
  %s18 = scalar_select 0, %s17, %s15
  $region1: #{tpu_custom_call.1} parent=0
    #allocation4 [shape = 'u8[8192]{0}', space=vmem, size = 0x2000, scoped, tag = 'input window, operand 0']
    #allocation5 [shape = 's32[2]{0}', space=sflag, size = 0x8, scoped, tag = 'scoped memory for tpu_custom_call.1']
    #allocation6 [shape = 's32[2]{0}', space=sflag, size = 0x8, scoped, tag = 'scoped memory for tpu_custom_call.1']
    #allocation7 [shape = 'u8[8192]{0}', space=vmem, size = 0x2000, scoped, tag = 'input window, operand 1']
    #allocation8 [shape = 's32[2]{0}', space=sflag, size = 0x8, scoped, tag = 'scoped memory for tpu_custom_call.1']
    #allocation9 [shape = 'u8[8192]{0}', space=vmem, size = 0x2000, scoped, tag = 'input window, operand 2']
    #allocation10 [shape = 'u8[16384]{0}', space=vmem, size = 0x4000, scoped, tag = 'input window, operand 4, single buffered']
    #allocation11 [shape = 's32[1]{0}', space=sflag, size = 0x4, scoped, tag = 'scoped memory for tpu_custom_call.1']
    #allocation12 [shape = 'u8[16384]{0}', space=vmem, size = 0x4000, scoped, tag = 'input window, operand 6, single buffered']
    #allocation13 [shape = 'u8[16384]{0}', space=vmem, size = 0x4000, scoped, tag = 'input window, operand 8, single buffered']
    #allocation14 [shape = 's32[1]{0}', space=sflag, size = 0x4, scoped, tag = 'scoped memory for tpu_custom_call.1']
    #allocation15 [shape = 'u8[16384]{0}', space=vmem, size = 0x4000, scoped, tag = 'input window, operand 10, single buffered']
    #allocation16 [shape = 'u8[8192]{0}', space=vmem, size = 0x2000, scoped, tag = 'output window, operand 0']
    %19 = vsyncpa [#allocation5], 0
    %s20 = scalar_lea.sflag [#allocation5], 1
    %21 = vsyncpa %s20, 0
    %22 = vsyncpa [#allocation8], 0
    %s23 = scalar_lea.sflag [#allocation8], 1
    %24 = vsyncpa %s23, 0
    %25 = vsyncpa [#allocation11], 0
    %26 = vsyncpa [#allocation14], 0
    %27 = vsyncpa [#allocation6], 0
    %s28 = scalar_lea.sflag [#allocation6], 1
    %29 = vsyncpa %s28, 0
    loop: start=0, step=1, limit=4
    $region2: #{tpu_custom_call.1} parent=1 // loop_pre_header
      _
    $region3: #{tpu_custom_call.1} parent=1 // loop_header
      %s31 = sphi 0, %s35
      %p32 = scmp.ge.s32.totalorder %s31, 4
      %s38 = sphi 0, %s50
      %s39 = sphi 0, %s46
      %s40 = sphi 0, %s38
      %s41 = sphi 0, %s39
      %s42 = sphi 0, %s40
      %s43 = sphi 0, %s41
      %s55 = sphi 0, %s57
      %s58 = sphi 0, %s55
      %s59 = sphi 0, %s58
      %s75 = sphi 0, %s59
      %s81 = sphi 0, %s83
      %s84 = sphi 0, %s81
      %s85 = sphi 0, %s84
      %s101 = sphi 0, %s85
      %s107 = sphi 0, %s109
      %s110 = sphi 0, %s107
      %s111 = sphi 0, %s110
      %s127 = sphi 0, %s111
      %s133 = sphi 0, %s135
      %s136 = sphi 0, %s133
      %s137 = sphi 0, %s136
      %s153 = sphi 0, %s137
      %s157 = sphi 0, %s157
      %s159 = sphi 0, %s157
      %s160 = sphi 0, %s159
      %s174 = sphi 0, %s160
      %s178 = sphi 0, %s178
      %s180 = sphi 0, %s178
      %s181 = sphi 0, %s180
      %s195 = sphi 0, %s181
      %s199 = sphi 0, %s199
      %s201 = sphi 0, %s199
      %s202 = sphi 0, %s201
      %s216 = sphi 0, %s202
      %s220 = sphi 0, %s220
      %s222 = sphi 0, %s220
      %s223 = sphi 0, %s222
      %s237 = sphi 0, %s223
      %s241 = sphi 0, %s241
      %s243 = sphi 0, %s241
      %s244 = sphi 0, %s243
      %s258 = sphi 0, %s244
      %s262 = sphi 0, %s262
      %s264 = sphi 0, %s262
      %s265 = sphi 0, %s264
      %s279 = sphi 0, %s265
      %s283 = sphi 0, %s283
      %s285 = sphi 0, %s283
      %s286 = sphi 0, %s285
      %s300 = sphi 0, %s286
      %s304 = sphi 0, %s304
      %s306 = sphi 0, %s304
      %s307 = sphi 0, %s306
      %s321 = sphi 0, %s307
      %s325 = sphi 0, %s325
      %s327 = sphi 0, %s325
      %s328 = sphi 0, %s327
      %s342 = sphi 0, %s328
      %s346 = sphi 0, %s346
      %s348 = sphi 0, %s346
      %s349 = sphi 0, %s348
      %s363 = sphi 0, %s349
      %s371 = sphi 0, %s373
      %s374 = sphi 0, %s371
      %s375 = sphi 0, %s374
      %s391 = sphi 0, %s375
    $region4: #{tpu_custom_call.1} parent=1 // loop_header_branch
      %34 = sbr.rel (%p32) target = $region8
    $region5: #{tpu_custom_call.1} parent=1 // loop_body
      %s36 = ssub.s32 %s31, 1
      %s37 = ssub.s32 %s31, 2
      %s44 = sadd.s32 1, %s39
      %p45 = scmp.ge.s32.totalorder %s44, 1
      %s46 = scalar_select %p45, 0, %s44
      %s47 = sadd.s32 1, %s38
      %s48 = scalar_select %p45, %s47, %s38
      %p49 = scmp.ge.s32.totalorder %s48, 2
      %s50 = scalar_select %p49, 0, %s48
      %s51 = ssub.s32 %s38, %s50
      %s52 = ssub.s32 %s39, %s46
      %s53 = sor.u32 %s51, %s52
      %p54 = scmp.eq.s32.totalorder %s53, 0
      %s56 = sadd.s32 %s55, 1
      %s57 = scalar_select %p54, %s55, %s56
      %p60 = pneg %p54
      %p61 = scmp.eq.s32.totalorder %s31, 1
      %p62 = por %p60, %p61
      %p63 = scmp.ne.s32.totalorder %s55, %s58
      %p64 = scmp.eq.s32.totalorder %s31, 0
      %p65 = por %p63, %p64
      %p66 = scmp.ne.s32.totalorder %s55, %s58
      %p67 = scmp.eq.s32.totalorder %s36, 1
      %p68 = por %p66, %p67
      %p69 = scmp.ne.s32.totalorder %s58, %s59
      %p70 = scmp.eq.s32.totalorder %s36, 0
      %p71 = por %p69, %p70
      %p72 = scmp.ne.s32.totalorder %s58, %s59
      %p73 = scmp.eq.s32.totalorder %s37, 1
      %p74 = por %p72, %p73
      %p76 = scmp.ne.s32.totalorder %s59, %s75
      %p77 = scmp.eq.s32.totalorder %s37, 0
      %p78 = por %p76, %p77
      %s79 = ssub.s32 %s38, %s50
      %p80 = scmp.eq.s32.totalorder %s79, 0
      %s82 = sadd.s32 %s81, 1
      %s83 = scalar_select %p80, %s81, %s82
      %p86 = pneg %p80
      %p87 = scmp.eq.s32.totalorder %s31, 1
      %p88 = por %p86, %p87
      %p89 = scmp.ne.s32.totalorder %s81, %s84
      %p90 = scmp.eq.s32.totalorder %s31, 0
      %p91 = por %p89, %p90
      %p92 = scmp.ne.s32.totalorder %s81, %s84
      %p93 = scmp.eq.s32.totalorder %s36, 1
      %p94 = por %p92, %p93
      %p95 = scmp.ne.s32.totalorder %s84, %s85
      %p96 = scmp.eq.s32.totalorder %s36, 0
      %p97 = por %p95, %p96
      %p98 = scmp.ne.s32.totalorder %s84, %s85
      %p99 = scmp.eq.s32.totalorder %s37, 1
      %p100 = por %p98, %p99
      %p102 = scmp.ne.s32.totalorder %s85, %s101
      %p103 = scmp.eq.s32.totalorder %s37, 0
      %p104 = por %p102, %p103
      %s105 = ssub.s32 %s38, %s50
      %p106 = scmp.eq.s32.totalorder %s105, 0
      %s108 = sadd.s32 %s107, 1
      %s109 = scalar_select %p106, %s107, %s108
      %p112 = pneg %p106
      %p113 = scmp.eq.s32.totalorder %s31, 1
      %p114 = por %p112, %p113
      %p115 = scmp.ne.s32.totalorder %s107, %s110
      %p116 = scmp.eq.s32.totalorder %s31, 0
      %p117 = por %p115, %p116
      %p118 = scmp.ne.s32.totalorder %s107, %s110
      %p119 = scmp.eq.s32.totalorder %s36, 1
      %p120 = por %p118, %p119
      %p121 = scmp.ne.s32.totalorder %s110, %s111
      %p122 = scmp.eq.s32.totalorder %s36, 0
      %p123 = por %p121, %p122
      %p124 = scmp.ne.s32.totalorder %s110, %s111
      %p125 = scmp.eq.s32.totalorder %s37, 1
      %p126 = por %p124, %p125
      %p128 = scmp.ne.s32.totalorder %s111, %s127
      %p129 = scmp.eq.s32.totalorder %s37, 0
      %p130 = por %p128, %p129
      %s131 = ssub.s32 %s38, %s50
      %p132 = scmp.eq.s32.totalorder %s131, 0
      %s134 = sadd.s32 %s133, 1
      %s135 = scalar_select %p132, %s133, %s134
      %p138 = pneg %p132
      %p139 = scmp.eq.s32.totalorder %s31, 1
      %p140 = por %p138, %p139
      %p141 = scmp.ne.s32.totalorder %s133, %s136
      %p142 = scmp.eq.s32.totalorder %s31, 0
      %p143 = por %p141, %p142
      %p144 = scmp.ne.s32.totalorder %s133, %s136
      %p145 = scmp.eq.s32.totalorder %s36, 1
      %p146 = por %p144, %p145
      %p147 = scmp.ne.s32.totalorder %s136, %s137
      %p148 = scmp.eq.s32.totalorder %s36, 0
      %p149 = por %p147, %p148
      %p150 = scmp.ne.s32.totalorder %s136, %s137
      %p151 = scmp.eq.s32.totalorder %s37, 1
      %p152 = por %p150, %p151
      %p154 = scmp.ne.s32.totalorder %s137, %s153
      %p155 = scmp.eq.s32.totalorder %s37, 0
      %p156 = por %p154, %p155
      %s158 = sadd.s32 %s157, 1
      %p161 = scmp.eq.s32.totalorder %s31, 1
      %p162 = scmp.ne.s32.totalorder %s157, %s159
      %p163 = scmp.eq.s32.totalorder %s31, 0
      %p164 = por %p162, %p163
      %p165 = scmp.ne.s32.totalorder %s157, %s159
      %p166 = scmp.eq.s32.totalorder %s36, 1
      %p167 = por %p165, %p166
      %p168 = scmp.ne.s32.totalorder %s159, %s160
      %p169 = scmp.eq.s32.totalorder %s36, 0
      %p170 = por %p168, %p169
      %p171 = scmp.ne.s32.totalorder %s159, %s160
      %p172 = scmp.eq.s32.totalorder %s37, 1
      %p173 = por %p171, %p172
      %p175 = scmp.ne.s32.totalorder %s160, %s174
      %p176 = scmp.eq.s32.totalorder %s37, 0
      %p177 = por %p175, %p176
      %s179 = sadd.s32 %s178, 1
      %p182 = scmp.eq.s32.totalorder %s31, 1
      %p183 = scmp.ne.s32.totalorder %s178, %s180
      %p184 = scmp.eq.s32.totalorder %s31, 0
      %p185 = por %p183, %p184
      %p186 = scmp.ne.s32.totalorder %s178, %s180
      %p187 = scmp.eq.s32.totalorder %s36, 1
      %p188 = por %p186, %p187
      %p189 = scmp.ne.s32.totalorder %s180, %s181
      %p190 = scmp.eq.s32.totalorder %s36, 0
      %p191 = por %p189, %p190
      %p192 = scmp.ne.s32.totalorder %s180, %s181
      %p193 = scmp.eq.s32.totalorder %s37, 1
      %p194 = por %p192, %p193
      %p196 = scmp.ne.s32.totalorder %s181, %s195
      %p197 = scmp.eq.s32.totalorder %s37, 0
      %p198 = por %p196, %p197
      %s200 = sadd.s32 %s199, 1
      %p203 = scmp.eq.s32.totalorder %s31, 1
      %p204 = scmp.ne.s32.totalorder %s199, %s201
      %p205 = scmp.eq.s32.totalorder %s31, 0
      %p206 = por %p204, %p205
      %p207 = scmp.ne.s32.totalorder %s199, %s201
      %p208 = scmp.eq.s32.totalorder %s36, 1
      %p209 = por %p207, %p208
      %p210 = scmp.ne.s32.totalorder %s201, %s202
      %p211 = scmp.eq.s32.totalorder %s36, 0
      %p212 = por %p210, %p211
      %p213 = scmp.ne.s32.totalorder %s201, %s202
      %p214 = scmp.eq.s32.totalorder %s37, 1
      %p215 = por %p213, %p214
      %p217 = scmp.ne.s32.totalorder %s202, %s216
      %p218 = scmp.eq.s32.totalorder %s37, 0
      %p219 = por %p217, %p218
      %s221 = sadd.s32 %s220, 1
      %p224 = scmp.eq.s32.totalorder %s31, 1
      %p225 = scmp.ne.s32.totalorder %s220, %s222
      %p226 = scmp.eq.s32.totalorder %s31, 0
      %p227 = por %p225, %p226
      %p228 = scmp.ne.s32.totalorder %s220, %s222
      %p229 = scmp.eq.s32.totalorder %s36, 1
      %p230 = por %p228, %p229
      %p231 = scmp.ne.s32.totalorder %s222, %s223
      %p232 = scmp.eq.s32.totalorder %s36, 0
      %p233 = por %p231, %p232
      %p234 = scmp.ne.s32.totalorder %s222, %s223
      %p235 = scmp.eq.s32.totalorder %s37, 1
      %p236 = por %p234, %p235
      %p238 = scmp.ne.s32.totalorder %s223, %s237
      %p239 = scmp.eq.s32.totalorder %s37, 0
      %p240 = por %p238, %p239
      %s242 = sadd.s32 %s241, 1
      %p245 = scmp.eq.s32.totalorder %s31, 1
      %p246 = scmp.ne.s32.totalorder %s241, %s243
      %p247 = scmp.eq.s32.totalorder %s31, 0
      %p248 = por %p246, %p247
      %p249 = scmp.ne.s32.totalorder %s241, %s243
      %p250 = scmp.eq.s32.totalorder %s36, 1
      %p251 = por %p249, %p250
      %p252 = scmp.ne.s32.totalorder %s243, %s244
      %p253 = scmp.eq.s32.totalorder %s36, 0
      %p254 = por %p252, %p253
      %p255 = scmp.ne.s32.totalorder %s243, %s244
      %p256 = scmp.eq.s32.totalorder %s37, 1
      %p257 = por %p255, %p256
      %p259 = scmp.ne.s32.totalorder %s244, %s258
      %p260 = scmp.eq.s32.totalorder %s37, 0
      %p261 = por %p259, %p260
      %s263 = sadd.s32 %s262, 1
      %p266 = scmp.eq.s32.totalorder %s31, 1
      %p267 = scmp.ne.s32.totalorder %s262, %s264
      %p268 = scmp.eq.s32.totalorder %s31, 0
      %p269 = por %p267, %p268
      %p270 = scmp.ne.s32.totalorder %s262, %s264
      %p271 = scmp.eq.s32.totalorder %s36, 1
      %p272 = por %p270, %p271
      %p273 = scmp.ne.s32.totalorder %s264, %s265
      %p274 = scmp.eq.s32.totalorder %s36, 0
      %p275 = por %p273, %p274
      %p276 = scmp.ne.s32.totalorder %s264, %s265
      %p277 = scmp.eq.s32.totalorder %s37, 1
      %p278 = por %p276, %p277
      %p280 = scmp.ne.s32.totalorder %s265, %s279
      %p281 = scmp.eq.s32.totalorder %s37, 0
      %p282 = por %p280, %p281
      %s284 = sadd.s32 %s283, 1
      %p287 = scmp.eq.s32.totalorder %s31, 1
      %p288 = scmp.ne.s32.totalorder %s283, %s285
      %p289 = scmp.eq.s32.totalorder %s31, 0
      %p290 = por %p288, %p289
      %p291 = scmp.ne.s32.totalorder %s283, %s285
      %p292 = scmp.eq.s32.totalorder %s36, 1
      %p293 = por %p291, %p292
      %p294 = scmp.ne.s32.totalorder %s285, %s286
      %p295 = scmp.eq.s32.totalorder %s36, 0
      %p296 = por %p294, %p295
      %p297 = scmp.ne.s32.totalorder %s285, %s286
      %p298 = scmp.eq.s32.totalorder %s37, 1
      %p299 = por %p297, %p298
      %p301 = scmp.ne.s32.totalorder %s286, %s300
      %p302 = scmp.eq.s32.totalorder %s37, 0
      %p303 = por %p301, %p302
      %s305 = sadd.s32 %s304, 1
      %p308 = scmp.eq.s32.totalorder %s31, 1
      %p309 = scmp.ne.s32.totalorder %s304, %s306
      %p310 = scmp.eq.s32.totalorder %s31, 0
      %p311 = por %p309, %p310
      %p312 = scmp.ne.s32.totalorder %s304, %s306
      %p313 = scmp.eq.s32.totalorder %s36, 1
      %p314 = por %p312, %p313
      %p315 = scmp.ne.s32.totalorder %s306, %s307
      %p316 = scmp.eq.s32.totalorder %s36, 0
      %p317 = por %p315, %p316
      %p318 = scmp.ne.s32.totalorder %s306, %s307
      %p319 = scmp.eq.s32.totalorder %s37, 1
      %p320 = por %p318, %p319
      %p322 = scmp.ne.s32.totalorder %s307, %s321
      %p323 = scmp.eq.s32.totalorder %s37, 0
      %p324 = por %p322, %p323
      %s326 = sadd.s32 %s325, 1
      %p329 = scmp.eq.s32.totalorder %s31, 1
      %p330 = scmp.ne.s32.totalorder %s325, %s327
      %p331 = scmp.eq.s32.totalorder %s31, 0
      %p332 = por %p330, %p331
      %p333 = scmp.ne.s32.totalorder %s325, %s327
      %p334 = scmp.eq.s32.totalorder %s36, 1
      %p335 = por %p333, %p334
      %p336 = scmp.ne.s32.totalorder %s327, %s328
      %p337 = scmp.eq.s32.totalorder %s36, 0
      %p338 = por %p336, %p337
      %p339 = scmp.ne.s32.totalorder %s327, %s328
      %p340 = scmp.eq.s32.totalorder %s37, 1
      %p341 = por %p339, %p340
      %p343 = scmp.ne.s32.totalorder %s328, %s342
      %p344 = scmp.eq.s32.totalorder %s37, 0
      %p345 = por %p343, %p344
      %s347 = sadd.s32 %s346, 1
      %p350 = scmp.eq.s32.totalorder %s31, 1
      %p351 = scmp.ne.s32.totalorder %s346, %s348
      %p352 = scmp.eq.s32.totalorder %s31, 0
      %p353 = por %p351, %p352
      %p354 = scmp.ne.s32.totalorder %s346, %s348
      %p355 = scmp.eq.s32.totalorder %s36, 1
      %p356 = por %p354, %p355
      %p357 = scmp.ne.s32.totalorder %s348, %s349
      %p358 = scmp.eq.s32.totalorder %s36, 0
      %p359 = por %p357, %p358
      %p360 = scmp.ne.s32.totalorder %s348, %s349
      %p361 = scmp.eq.s32.totalorder %s37, 1
      %p362 = por %p360, %p361
      %p364 = scmp.ne.s32.totalorder %s349, %s363
      %p365 = scmp.eq.s32.totalorder %s37, 0
      %p366 = por %p364, %p365
      %s367 = ssub.s32 %s38, %s50
      %s368 = ssub.s32 %s39, %s46
      %s369 = sor.u32 %s367, %s368
      %p370 = scmp.eq.s32.totalorder %s369, 0
      %s372 = sadd.s32 %s371, 1
      %s373 = scalar_select %p370, %s371, %s372
      %p376 = pneg %p370
      %p377 = scmp.eq.s32.totalorder %s31, 1
      %p378 = por %p376, %p377
      %p379 = scmp.ne.s32.totalorder %s371, %s374
      %p380 = scmp.eq.s32.totalorder %s31, 0
      %p381 = por %p379, %p380
      %p382 = scmp.ne.s32.totalorder %s371, %s374
      %p383 = scmp.eq.s32.totalorder %s36, 1
      %p384 = por %p382, %p383
      %p385 = scmp.ne.s32.totalorder %s374, %s375
      %p386 = scmp.eq.s32.totalorder %s36, 0
      %p387 = por %p385, %p386
      %p388 = scmp.ne.s32.totalorder %s374, %s375
      %p389 = scmp.eq.s32.totalorder %s37, 1
      %p390 = por %p388, %p389
      %p392 = scmp.ne.s32.totalorder %s375, %s391
      %p393 = scmp.eq.s32.totalorder %s37, 0
      %p394 = por %p392, %p393
      %p395 = scmp.le.s32.totalorder 1, %s31
      %p396 = scmp.lt.s32.totalorder %s31, 3
      %p397 = pnand %p395, %p396
      %p398 = pneg %p397
      // Predicated region
      $region9: #{tpu_custom_call.1} parent=5 // pred_check
        _
      $region10: #{tpu_custom_call.1} parent=5 // pred_check_branch
        %400 = sbr.rel (%p397) target = $region12
      $region11: #{tpu_custom_call.1} parent=5 // pred_region
        %s401 = ssub.s32 %s31, 1
        // Predicated region
        $region13: #{tpu_custom_call.1} parent=11 // pred_check
          %p402 = pneg %p170
        $region14: #{tpu_custom_call.1} parent=11 // pred_check_branch
          %404 = sbr.rel (%p402) target = $region16
        $region15: #{tpu_custom_call.1} parent=11 // pred_region
          %s406 = ssub.s32 512, 512
          %407 = vsyncadd [#allocation11], %s406
          %s408 = sshll.u32 [#allocation10], 4
          %s409 = int_to_ptr.vmem [resolvable:$true] %s408
          %414 = dma.hbm_to_vmem [thread:$0]  %s4, 512, %s409, [#allocation11], 128, 128, 8
        $region16: #{tpu_custom_call.1} parent=11 // pred_fallthru
          _
        // Predicated region
        $region17: #{tpu_custom_call.1} parent=11 // pred_check
          %p415 = pneg %p191
        $region18: #{tpu_custom_call.1} parent=11 // pred_check_branch
          %417 = sbr.rel (%p415) target = $region20
        $region19: #{tpu_custom_call.1} parent=11 // pred_region
          _
        $region20: #{tpu_custom_call.1} parent=11 // pred_fallthru
          _
        // Predicated region
        $region21: #{tpu_custom_call.1} parent=11 // pred_check
          %p418 = pneg %p212
        $region22: #{tpu_custom_call.1} parent=11 // pred_check_branch
          %420 = sbr.rel (%p418) target = $region24
        $region23: #{tpu_custom_call.1} parent=11 // pred_region
          %s422 = ssub.s32 512, 512
          %423 = vsyncadd [#allocation11], %s422
          %s424 = sshll.u32 [#allocation12], 4
          %s425 = int_to_ptr.vmem [resolvable:$true] %s424
          %430 = dma.hbm_to_vmem [thread:$0]  %s6, 512, %s425, [#allocation11], 128, 128, 8
        $region24: #{tpu_custom_call.1} parent=11 // pred_fallthru
          _
        // Predicated region
        $region25: #{tpu_custom_call.1} parent=11 // pred_check
          %p431 = pneg %p233
        $region26: #{tpu_custom_call.1} parent=11 // pred_check_branch
          %433 = sbr.rel (%p431) target = $region28
        $region27: #{tpu_custom_call.1} parent=11 // pred_region
          _
        $region28: #{tpu_custom_call.1} parent=11 // pred_fallthru
          _
        // Predicated region
        $region29: #{tpu_custom_call.1} parent=11 // pred_check
          %p434 = pneg %p254
        $region30: #{tpu_custom_call.1} parent=11 // pred_check_branch
          %436 = sbr.rel (%p434) target = $region32
        $region31: #{tpu_custom_call.1} parent=11 // pred_region
          %s438 = ssub.s32 512, 512
          %439 = vsyncadd [#allocation14], %s438
          %s440 = sshll.u32 [#allocation13], 4
          %s441 = int_to_ptr.vmem [resolvable:$true] %s440
          %446 = dma.hbm_to_vmem [thread:$0]  %s8, 512, %s441, [#allocation14], 128, 128, 8
        $region32: #{tpu_custom_call.1} parent=11 // pred_fallthru
          _
        // Predicated region
        $region33: #{tpu_custom_call.1} parent=11 // pred_check
          %p447 = pneg %p275
        $region34: #{tpu_custom_call.1} parent=11 // pred_check_branch
          %449 = sbr.rel (%p447) target = $region36
        $region35: #{tpu_custom_call.1} parent=11 // pred_region
          _
        $region36: #{tpu_custom_call.1} parent=11 // pred_fallthru
          _
        // Predicated region
        $region37: #{tpu_custom_call.1} parent=11 // pred_check
          %p450 = pneg %p296
        $region38: #{tpu_custom_call.1} parent=11 // pred_check_branch
          %452 = sbr.rel (%p450) target = $region40
        $region39: #{tpu_custom_call.1} parent=11 // pred_region
          %s454 = ssub.s32 512, 512
          %455 = vsyncadd [#allocation14], %s454
          %s456 = sshll.u32 [#allocation15], 4
          %s457 = int_to_ptr.vmem [resolvable:$true] %s456
          %462 = dma.hbm_to_vmem [thread:$0]  %s10, 512, %s457, [#allocation14], 128, 128, 8
        $region40: #{tpu_custom_call.1} parent=11 // pred_fallthru
          _
        // Predicated region
        $region41: #{tpu_custom_call.1} parent=11 // pred_check
          %p463 = pneg %p317
        $region42: #{tpu_custom_call.1} parent=11 // pred_check_branch
          %465 = sbr.rel (%p463) target = $region44
        $region43: #{tpu_custom_call.1} parent=11 // pred_region
          _
        $region44: #{tpu_custom_call.1} parent=11 // pred_fallthru
          _
        // Predicated region
        $region45: #{tpu_custom_call.1} parent=11 // pred_check
          %p466 = pneg %p338
        $region46: #{tpu_custom_call.1} parent=11 // pred_check_branch
          %468 = sbr.rel (%p466) target = $region48
        $region47: #{tpu_custom_call.1} parent=11 // pred_region
          _
        $region48: #{tpu_custom_call.1} parent=11 // pred_fallthru
          _
        // Predicated region
        $region49: #{tpu_custom_call.1} parent=11 // pred_check
          %p469 = pneg %p359
        $region50: #{tpu_custom_call.1} parent=11 // pred_check_branch
          %471 = sbr.rel (%p469) target = $region52
        $region51: #{tpu_custom_call.1} parent=11 // pred_region
          _
        $region52: #{tpu_custom_call.1} parent=11 // pred_fallthru
          _
      $region12: #{tpu_custom_call.1} parent=5 // pred_fallthru
        _
      %p472 = scmp.lt.s32.totalorder %s31, 2
      // Predicated region
      $region53: #{tpu_custom_call.1} parent=5 // pred_check
        %p473 = pneg %p472
      $region54: #{tpu_custom_call.1} parent=5 // pred_check_branch
        %475 = sbr.rel (%p473) target = $region56
      $region55: #{tpu_custom_call.1} parent=5 // pred_region
        // Predicated region
        $region57: #{tpu_custom_call.1} parent=55 // pred_check
          %p476 = pneg %p65
        $region58: #{tpu_custom_call.1} parent=55 // pred_check_branch
          %478 = sbr.rel (%p476) target = $region60
        $region59: #{tpu_custom_call.1} parent=55 // pred_region
          %s479 = sand.u32 %s55, 1
          %s480 = scalar_lea.sflag [#allocation5], %s479
          %s481 = sand.u32 %s55, 1
          %s482 = smul.addr %s481, 8
          %s483 = scalar_lea.vmem [#allocation4], %s482
          %s485 = ssub.s32 128, 128
          %486 = vsyncadd %s480, %s485
          %s487 = sadd.s32 %s39, %s38
          %s488 = smul.addr %s487, 128
          %s489 = scalar_lea.hbm %s0, %s488
          %s491 = sshll.u32 %s483, 4
          %s492 = int_to_ptr.vmem [resolvable:$true] %s491
          %494 = dma.hbm_to_vmem [thread:$0]  %s489, 128, %s492, %s480
        $region60: #{tpu_custom_call.1} parent=55 // pred_fallthru
          _
        // Predicated region
        $region61: #{tpu_custom_call.1} parent=55 // pred_check
          %p495 = pneg %p91
        $region62: #{tpu_custom_call.1} parent=55 // pred_check_branch
          %497 = sbr.rel (%p495) target = $region64
        $region63: #{tpu_custom_call.1} parent=55 // pred_region
          %s498 = sand.u32 %s31, 1
          %s499 = scalar_lea.sflag [#allocation8], %s498
          %s500 = sand.u32 %s81, 1
          %s501 = smul.addr %s500, 8
          %s502 = scalar_lea.vmem [#allocation7], %s501
          %s504 = ssub.s32 128, 128
          %505 = vsyncadd %s499, %s504
          %s506 = smul.addr %s38, 128
          %s507 = scalar_lea.hbm %s1, %s506
          %s509 = sshll.u32 %s502, 4
          %s510 = int_to_ptr.vmem [resolvable:$true] %s509
          %512 = dma.hbm_to_vmem [thread:$0]  %s507, 128, %s510, %s499
        $region64: #{tpu_custom_call.1} parent=55 // pred_fallthru
          _
        // Predicated region
        $region65: #{tpu_custom_call.1} parent=55 // pred_check
          %p513 = pneg %p117
        $region66: #{tpu_custom_call.1} parent=55 // pred_check_branch
          %515 = sbr.rel (%p513) target = $region68
        $region67: #{tpu_custom_call.1} parent=55 // pred_region
          %s516 = sand.u32 %s31, 1
          %s517 = scalar_lea.sflag [#allocation8], %s516
          %s518 = sand.u32 %s107, 1
          %s519 = smul.addr %s518, 8
          %s520 = scalar_lea.vmem [#allocation9], %s519
          %s522 = ssub.s32 128, 128
          %523 = vsyncadd %s517, %s522
          %s524 = smul.addr %s38, 128
          %s525 = scalar_lea.hbm %s2, %s524
          %s527 = sshll.u32 %s520, 4
          %s528 = int_to_ptr.vmem [resolvable:$true] %s527
          %530 = dma.hbm_to_vmem [thread:$0]  %s525, 128, %s528, %s517
        $region68: #{tpu_custom_call.1} parent=55 // pred_fallthru
          _
        // Predicated region
        $region69: #{tpu_custom_call.1} parent=55 // pred_check
          %p531 = pneg %p143
        $region70: #{tpu_custom_call.1} parent=55 // pred_check_branch
          %533 = sbr.rel (%p531) target = $region72
        $region71: #{tpu_custom_call.1} parent=55 // pred_region
          %p534 = scmp.lt.s32.totalorder %s38, 1
          %s535 = scalar_select %p534, %s38, 1
          %s536 = scalar_lea.vmem %s3, %s535
        $region72: #{tpu_custom_call.1} parent=55 // pred_fallthru
          _
      $region56: #{tpu_custom_call.1} parent=5 // pred_fallthru
        _
      %p537 = scmp.le.s32.totalorder 1, %s31
      %p538 = scmp.lt.s32.totalorder %s31, 3
      %p539 = pnand %p537, %p538
      %p540 = pneg %p539
      // Predicated region
      $region73: #{tpu_custom_call.1} parent=5 // pred_check
        _
      $region74: #{tpu_custom_call.1} parent=5 // pred_check_branch
        %542 = sbr.rel (%p539) target = $region76
      $region75: #{tpu_custom_call.1} parent=5 // pred_region
        %s543 = ssub.s32 %s31, 1
        %s544 = sand.u32 %s58, 1
        %s545 = scalar_lea.sflag [#allocation5], %s544
        %s546 = sand.u32 %s58, 1
        %s547 = smul.addr %s546, 8
        %s548 = scalar_lea.vmem [#allocation4], %s547
        // Predicated region
        $region77: #{tpu_custom_call.1} parent=75 // pred_check
          %p549 = pneg %p71
        $region78: #{tpu_custom_call.1} parent=75 // pred_check_branch
          %551 = sbr.rel (%p549) target = $region80
        $region79: #{tpu_custom_call.1} parent=75 // pred_region
          %552 = dma.done %s545, 128
        $region80: #{tpu_custom_call.1} parent=75 // pred_fallthru
          _
        %s553 = sand.u32 %s36, 1
        %s554 = scalar_lea.sflag [#allocation8], %s553
        %s555 = sand.u32 %s84, 1
        %s556 = smul.addr %s555, 8
        %s557 = scalar_lea.vmem [#allocation7], %s556
        // Predicated region
        $region81: #{tpu_custom_call.1} parent=75 // pred_check
          %p558 = pneg %p97
        $region82: #{tpu_custom_call.1} parent=75 // pred_check_branch
          %560 = sbr.rel (%p558) target = $region84
        $region83: #{tpu_custom_call.1} parent=75 // pred_region
          %561 = dma.done %s554, 128
        $region84: #{tpu_custom_call.1} parent=75 // pred_fallthru
          _
        %s562 = sand.u32 %s36, 1
        %s563 = scalar_lea.sflag [#allocation8], %s562
        %s564 = sand.u32 %s110, 1
        %s565 = smul.addr %s564, 8
        %s566 = scalar_lea.vmem [#allocation9], %s565
        // Predicated region
        $region85: #{tpu_custom_call.1} parent=75 // pred_check
          %p567 = pneg %p123
        $region86: #{tpu_custom_call.1} parent=75 // pred_check_branch
          %569 = sbr.rel (%p567) target = $region88
        $region87: #{tpu_custom_call.1} parent=75 // pred_region
          %570 = dma.done %s563, 128
        $region88: #{tpu_custom_call.1} parent=75 // pred_fallthru
          _
        // Predicated region
        $region89: #{tpu_custom_call.1} parent=75 // pred_check
          %p571 = pneg %p170
        $region90: #{tpu_custom_call.1} parent=75 // pred_check_branch
          %573 = sbr.rel (%p571) target = $region92
        $region91: #{tpu_custom_call.1} parent=75 // pred_region
          %574 = dma.done [#allocation11], 512
        $region92: #{tpu_custom_call.1} parent=75 // pred_fallthru
          _
        // Predicated region
        $region93: #{tpu_custom_call.1} parent=75 // pred_check
          %p575 = pneg %p212
        $region94: #{tpu_custom_call.1} parent=75 // pred_check_branch
          %577 = sbr.rel (%p575) target = $region96
        $region95: #{tpu_custom_call.1} parent=75 // pred_region
          %578 = dma.done [#allocation11], 512
        $region96: #{tpu_custom_call.1} parent=75 // pred_fallthru
          _
        // Predicated region
        $region97: #{tpu_custom_call.1} parent=75 // pred_check
          %p579 = pneg %p254
        $region98: #{tpu_custom_call.1} parent=75 // pred_check_branch
          %581 = sbr.rel (%p579) target = $region100
        $region99: #{tpu_custom_call.1} parent=75 // pred_region
          %582 = dma.done [#allocation14], 512
        $region100: #{tpu_custom_call.1} parent=75 // pred_fallthru
          _
        // Predicated region
        $region101: #{tpu_custom_call.1} parent=75 // pred_check
          %p583 = pneg %p296
        $region102: #{tpu_custom_call.1} parent=75 // pred_check_branch
          %585 = sbr.rel (%p583) target = $region104
        $region103: #{tpu_custom_call.1} parent=75 // pred_region
          %586 = dma.done [#allocation14], 512
        $region104: #{tpu_custom_call.1} parent=75 // pred_fallthru
          _
        %s587 = sand.u32 %s58, 1
        %s588 = scalar_lea.sflag [#allocation5], %s587
        %s589 = sand.u32 %s58, 1
        %s590 = smul.addr %s589, 8
        %s591 = scalar_lea.vmem [#allocation4], %s590
        %p592 = pneg %p71
        %p593 = pneg %p68
        %s594 = sand.u32 %s36, 1
        %s595 = scalar_lea.sflag [#allocation8], %s594
        %s596 = sand.u32 %s84, 1
        %s597 = smul.addr %s596, 8
        %s598 = scalar_lea.vmem [#allocation7], %s597
        %p599 = pneg %p97
        %p600 = pneg %p94
        %s601 = sand.u32 %s36, 1
        %s602 = scalar_lea.sflag [#allocation8], %s601
        %s603 = sand.u32 %s110, 1
        %s604 = smul.addr %s603, 8
        %s605 = scalar_lea.vmem [#allocation9], %s604
        %p606 = pneg %p123
        %p607 = pneg %p120
        %p608 = scmp.lt.s32.totalorder %s40, 1
        %s609 = scalar_select %p608, %s40, 1
        %s610 = scalar_lea.vmem %s3, %s609
        %p611 = pneg %p149
        %p612 = pneg %p146
        %p613 = pneg %p170
        %p614 = pneg %p167
        %p615 = pneg %p191
        %p616 = pneg %p188
        %p617 = pneg %p212
        %p618 = pneg %p209
        %p619 = pneg %p233
        %p620 = pneg %p230
        %p621 = pneg %p254
        %p622 = pneg %p251
        %p623 = pneg %p275
        %p624 = pneg %p272
        %p625 = pneg %p296
        %p626 = pneg %p293
        %p627 = pneg %p317
        %p628 = pneg %p314
        %p629 = pneg %p338
        %p630 = pneg %p335
        %p631 = pneg %p359
        %p632 = pneg %p356
        %p633 = pneg %p387
        %p634 = pneg %p384
        %s635 = sand.u32 %s374, 1
        %s636 = scalar_lea.sflag [#allocation6], %s635
        %s637 = sand.u32 %s374, 1
        %s638 = smul.addr %s637, 8
        %s639 = scalar_lea.vmem [#allocation16], %s638
        %p640 = scmp.lt.s32.totalorder %s40, 1
        %s641 = scalar_select %p640, %s40, 1
        %s642 = scalar_lea.vmem %s3, %s641
        %p643 = scmp.eq.s32.totalorder %s41, 0
        // Predicated region
        $region105: #{tpu_custom_call.1} parent=75 // pred_check
          %p644 = pneg %p643
        $region106: #{tpu_custom_call.1} parent=75 // pred_check_branch
          %646 = sbr.rel (%p644) target = $region108
        $region107: #{tpu_custom_call.1} parent=75 // pred_region
          %v647 = vld [vmem:[%s557] sm:$0xff]
          %v648 = vld [vmem:[#allocation12] sm:$0xff]
          %v649 = vld [vmem:[#allocation12 + $0x8] sm:$0xff]
          %v650 = vld [vmem:[#allocation12 + $0x10] sm:$0xff]
          %v651 = vld [vmem:[#allocation12 + $0x18] sm:$0xff]
          %v652 = vld [vmem:[%s7] sm:$0x1]
          %v654 = vlaneseq
          %v655 = vshrl.u32 %v654, 7
          %v656 = vsub.s32 0, %v655
          %v657 = vrot.slane %v652, %v656
          %vm659 = vcmask 261120
          %v661 = vsel %vm659, %v647, 0
          %663 = vmatprep.subr.mxu0 0.0
          %664 = vmatpush1.msra.mxu0 0.0
          %665 = vmatprep.subr.mxu0 0.0
          %666 = vmatpush1.msra.mxu0 0.0
          %667 = vmatprep.subr.mxu0 0.0
          %668 = vmatpush1.msra.mxu0 0.0
          %669 = vmatprep.subr.mxu0 0.0
          %670 = vmatpush1.msra.mxu0 0.0
          %671 = vmatprep.subr.mxu0 0.0
          %672 = vmatpush1.msra.mxu0 0.0
          %673 = vmatprep.subr.mxu0 0.0
          %674 = vmatpush1.msra.mxu0 0.0
          %675 = vmatprep.subr.mxu0 0.0
          %676 = vmatpush1.msra.mxu0 0.0
          %677 = vmatprep.subr.mxu0 0.0
          %678 = vmatpush1.msra.mxu0 0.0
          %679 = vmatprep.subr.mxu0 0.0
          %680 = vmatpush1.msra.mxu0 0.0
          %681 = vmatprep.subr.mxu0 0.0
          %682 = vmatpush1.msra.mxu0 0.0
          %683 = vmatprep.subr.mxu0 0.0
          %684 = vmatpush1.msra.mxu0 0.0
          %685 = vmatprep.subr.mxu0 0.0
          %686 = vmatpush1.msra.mxu0 0.0
          %687 = vmatprep.subr.mxu0 0.0
          %688 = vmatpush1.msra.mxu0 %v651
          %689 = vmatprep.subr.mxu0 0.0
          %690 = vmatpush1.msra.mxu0 %v650
          %691 = vmatprep.subr.mxu0 0.0
          %692 = vmatpush1.msra.mxu0 %v649
          %693 = vmatprep.subr.mxu0 0.0
          %694 = vmatpush1.msra.mxu0 %v648
          %695 = vmatprep.subr.mxu0 0.0
          %696 = vmatpush2.msra.mxu0 0.0
          %697 = vmatprep.subr.mxu0 0.0
          %698 = vmatpush2.msra.mxu0 0.0
          %699 = vmatprep.subr.mxu0 0.0
          %700 = vmatpush2.msra.mxu0 0.0
          %701 = vmatprep.subr.mxu0 0.0
          %702 = vmatpush2.msra.mxu0 0.0
          %703 = vmatprep.subr.mxu0 0.0
          %704 = vmatpush2.msra.mxu0 0.0
          %705 = vmatprep.subr.mxu0 0.0
          %706 = vmatpush2.msra.mxu0 0.0
          %707 = vmatprep.subr.mxu0 0.0
          %708 = vmatpush2.msra.mxu0 0.0
          %709 = vmatprep.subr.mxu0 0.0
          %710 = vmatpush2.msra.mxu0 0.0
          %711 = vmatprep.subr.mxu0 0.0
          %712 = vmatpush2.msra.mxu0 0.0
          %713 = vmatprep.subr.mxu0 0.0
          %714 = vmatpush2.msra.mxu0 0.0
          %715 = vmatprep.subr.mxu0 0.0
          %716 = vmatpush2.msra.mxu0 0.0
          %717 = vmatprep.subr.mxu0 0.0
          %718 = vmatpush2.msra.mxu0 0.0
          %719 = vmatprep.subr.mxu0 0.0
          %720 = vmatpush2.msra.mxu0 0.0
          %721 = vmatprep.subr.mxu0 0.0
          %722 = vmatpush2.msra.mxu0 0.0
          %723 = vmatprep.subr.mxu0 0.0
          %724 = vmatpush2.msra.mxu0 0.0
          %725 = vmatprep.subr.mxu0 0.0
          %726 = vmatpush2.msra.mxu0 0.0
          %727 = vmatprep.mubr.f32.mxu0 0.0
          %728 = vmatmul.mubr.f32.gmra.mxu0 %v661
          %v729 = vpop.f32.mrf.mxu0
          %v730 = vadd.f32 %v657, %v729
          %v731 = vpop.f32.mrf.mxu0
          %732 = vdwg.mxu0
          %733 = vst.msk [vmem:[#allocation2] sm:$0xff] %vm659, %v730
          %v734 = vld [vmem:[%s566] sm:$0xff]
          %v735 = vld [vmem:[#allocation13] sm:$0xff]
          %v736 = vld [vmem:[#allocation13 + $0x8] sm:$0xff]
          %v737 = vld [vmem:[#allocation13 + $0x10] sm:$0xff]
          %v738 = vld [vmem:[#allocation13 + $0x18] sm:$0xff]
          %v739 = vld [vmem:[%s9] sm:$0x1]
          %v741 = vlaneseq
          %v742 = vshrl.u32 %v741, 7
          %v743 = vsub.s32 0, %v742
          %v744 = vrot.slane %v739, %v743
          %v747 = vsel %vm659, %v734, 0
          %749 = vmatprep.subr.mxu0 0.0
          %750 = vmatpush1.msra.mxu0 0.0
          %751 = vmatprep.subr.mxu0 0.0
          %752 = vmatpush1.msra.mxu0 0.0
          %753 = vmatprep.subr.mxu0 0.0
          %754 = vmatpush1.msra.mxu0 0.0
          %755 = vmatprep.subr.mxu0 0.0
          %756 = vmatpush1.msra.mxu0 0.0
          %757 = vmatprep.subr.mxu0 0.0
          %758 = vmatpush1.msra.mxu0 0.0
          %759 = vmatprep.subr.mxu0 0.0
          %760 = vmatpush1.msra.mxu0 0.0
          %761 = vmatprep.subr.mxu0 0.0
          %762 = vmatpush1.msra.mxu0 0.0
          %763 = vmatprep.subr.mxu0 0.0
          %764 = vmatpush1.msra.mxu0 0.0
          %765 = vmatprep.subr.mxu0 0.0
          %766 = vmatpush1.msra.mxu0 0.0
          %767 = vmatprep.subr.mxu0 0.0
          %768 = vmatpush1.msra.mxu0 0.0
          %769 = vmatprep.subr.mxu0 0.0
          %770 = vmatpush1.msra.mxu0 0.0
          %771 = vmatprep.subr.mxu0 0.0
          %772 = vmatpush1.msra.mxu0 0.0
          %773 = vmatprep.subr.mxu0 0.0
          %774 = vmatpush1.msra.mxu0 %v738
          %775 = vmatprep.subr.mxu0 0.0
          %776 = vmatpush1.msra.mxu0 %v737
          %777 = vmatprep.subr.mxu0 0.0
          %778 = vmatpush1.msra.mxu0 %v736
          %779 = vmatprep.subr.mxu0 0.0
          %780 = vmatpush1.msra.mxu0 %v735
          %781 = vmatprep.subr.mxu0 0.0
          %782 = vmatpush2.msra.mxu0 0.0
          %783 = vmatprep.subr.mxu0 0.0
          %784 = vmatpush2.msra.mxu0 0.0
          %785 = vmatprep.subr.mxu0 0.0
          %786 = vmatpush2.msra.mxu0 0.0
          %787 = vmatprep.subr.mxu0 0.0
          %788 = vmatpush2.msra.mxu0 0.0
          %789 = vmatprep.subr.mxu0 0.0
          %790 = vmatpush2.msra.mxu0 0.0
          %791 = vmatprep.subr.mxu0 0.0
          %792 = vmatpush2.msra.mxu0 0.0
          %793 = vmatprep.subr.mxu0 0.0
          %794 = vmatpush2.msra.mxu0 0.0
          %795 = vmatprep.subr.mxu0 0.0
          %796 = vmatpush2.msra.mxu0 0.0
          %797 = vmatprep.subr.mxu0 0.0
          %798 = vmatpush2.msra.mxu0 0.0
          %799 = vmatprep.subr.mxu0 0.0
          %800 = vmatpush2.msra.mxu0 0.0
          %801 = vmatprep.subr.mxu0 0.0
          %802 = vmatpush2.msra.mxu0 0.0
          %803 = vmatprep.subr.mxu0 0.0
          %804 = vmatpush2.msra.mxu0 0.0
          %805 = vmatprep.subr.mxu0 0.0
          %806 = vmatpush2.msra.mxu0 0.0
          %807 = vmatprep.subr.mxu0 0.0
          %808 = vmatpush2.msra.mxu0 0.0
          %809 = vmatprep.subr.mxu0 0.0
          %810 = vmatpush2.msra.mxu0 0.0
          %811 = vmatprep.subr.mxu0 0.0
          %812 = vmatpush2.msra.mxu0 0.0
          %813 = vmatprep.mubr.f32.mxu0 0.0
          %814 = vmatmul.mubr.f32.gmra.mxu0 %v747
          %v815 = vpop.f32.mrf.mxu0
          %v816 = vadd.f32 %v744, %v815
          %v817 = vpop.f32.mrf.mxu0
          %818 = vdwg.mxu0
          %819 = vst.msk [vmem:[#allocation3] sm:$0xff] %vm659, %v816
        $region108: #{tpu_custom_call.1} parent=75 // pred_fallthru
          _
        %v820 = vld [vmem:[%s548] sm:$0xff]
        %v821 = vld [vmem:[#allocation10] sm:$0xff]
        %v822 = vld [vmem:[#allocation10 + $0x8] sm:$0xff]
        %v823 = vld [vmem:[#allocation10 + $0x10] sm:$0xff]
        %v824 = vld [vmem:[#allocation10 + $0x18] sm:$0xff]
        %v825 = vld [vmem:[%s5] sm:$0x1]
        %v827 = vlaneseq
        %v828 = vshrl.u32 %v827, 7
        %v829 = vsub.s32 0, %v828
        %v830 = vrot.slane %v825, %v829
        %vm832 = vcmask 261120
        %v834 = vsel %vm832, %v820, 0
        %836 = vmatprep.subr.mxu0 0.0
        %837 = vmatpush1.msra.mxu0 0.0
        %838 = vmatprep.subr.mxu0 0.0
        %839 = vmatpush1.msra.mxu0 0.0
        %840 = vmatprep.subr.mxu0 0.0
        %841 = vmatpush1.msra.mxu0 0.0
        %842 = vmatprep.subr.mxu0 0.0
        %843 = vmatpush1.msra.mxu0 0.0
        %844 = vmatprep.subr.mxu0 0.0
        %845 = vmatpush1.msra.mxu0 0.0
        %846 = vmatprep.subr.mxu0 0.0
        %847 = vmatpush1.msra.mxu0 0.0
        %848 = vmatprep.subr.mxu0 0.0
        %849 = vmatpush1.msra.mxu0 0.0
        %850 = vmatprep.subr.mxu0 0.0
        %851 = vmatpush1.msra.mxu0 0.0
        %852 = vmatprep.subr.mxu0 0.0
        %853 = vmatpush1.msra.mxu0 0.0
        %854 = vmatprep.subr.mxu0 0.0
        %855 = vmatpush1.msra.mxu0 0.0
        %856 = vmatprep.subr.mxu0 0.0
        %857 = vmatpush1.msra.mxu0 0.0
        %858 = vmatprep.subr.mxu0 0.0
        %859 = vmatpush1.msra.mxu0 0.0
        %860 = vmatprep.subr.mxu0 0.0
        %861 = vmatpush1.msra.mxu0 %v824
        %862 = vmatprep.subr.mxu0 0.0
        %863 = vmatpush1.msra.mxu0 %v823
        %864 = vmatprep.subr.mxu0 0.0
        %865 = vmatpush1.msra.mxu0 %v822
        %866 = vmatprep.subr.mxu0 0.0
        %867 = vmatpush1.msra.mxu0 %v821
        %868 = vmatprep.subr.mxu0 0.0
        %869 = vmatpush2.msra.mxu0 0.0
        %870 = vmatprep.subr.mxu0 0.0
        %871 = vmatpush2.msra.mxu0 0.0
        %872 = vmatprep.subr.mxu0 0.0
        %873 = vmatpush2.msra.mxu0 0.0
        %874 = vmatprep.subr.mxu0 0.0
        %875 = vmatpush2.msra.mxu0 0.0
        %876 = vmatprep.subr.mxu0 0.0
        %877 = vmatpush2.msra.mxu0 0.0
        %878 = vmatprep.subr.mxu0 0.0
        %879 = vmatpush2.msra.mxu0 0.0
        %880 = vmatprep.subr.mxu0 0.0
        %881 = vmatpush2.msra.mxu0 0.0
        %882 = vmatprep.subr.mxu0 0.0
        %883 = vmatpush2.msra.mxu0 0.0
        %884 = vmatprep.subr.mxu0 0.0
        %885 = vmatpush2.msra.mxu0 0.0
        %886 = vmatprep.subr.mxu0 0.0
        %887 = vmatpush2.msra.mxu0 0.0
        %888 = vmatprep.subr.mxu0 0.0
        %889 = vmatpush2.msra.mxu0 0.0
        %890 = vmatprep.subr.mxu0 0.0
        %891 = vmatpush2.msra.mxu0 0.0
        %892 = vmatprep.subr.mxu0 0.0
        %893 = vmatpush2.msra.mxu0 0.0
        %894 = vmatprep.subr.mxu0 0.0
        %895 = vmatpush2.msra.mxu0 0.0
        %896 = vmatprep.subr.mxu0 0.0
        %897 = vmatpush2.msra.mxu0 0.0
        %898 = vmatprep.subr.mxu0 0.0
        %899 = vmatpush2.msra.mxu0 0.0
        %900 = vmatprep.mubr.f32.mxu0 0.0
        %901 = vmatmul.mubr.f32.gmra.mxu0 %v834
        %v902 = vpop.f32.mrf.mxu0
        %v903 = vadd.f32 %v830, %v902
        %v904 = vpop.f32.mrf.mxu0
        %905 = vdwg.mxu0
        %v906 = vld [vmem:[%s642] sm:$0x1]
        %v907 = vld [vmem:[#allocation2] sm:$0xff]
        %v908 = vld [vmem:[#allocation3] sm:$0xff]
        %v910 = vlaneseq
        %v911 = vshrl.u32 %v910, 7
        %v912 = vsub.s32 0, %v911
        %v913 = vrot.slane %v906, %v912
        %vm915 = vcmask 64512
        %v917 = vsel %vm915, %v903, 0
        %v920 = vsel %vm915, %v907, 0
        %922 = vmatprep.subr.mxu0 0.0
        %923 = vmatpush1.xpose.msra.mxu0 0.0
        %924 = vmatprep.subr.mxu0 0.0
        %925 = vmatpush1.xpose.msra.mxu0 0.0
        %926 = vmatprep.subr.mxu0 0.0
        %927 = vmatpush1.xpose.msra.mxu0 0.0
        %928 = vmatprep.subr.mxu0 0.0
        %929 = vmatpush1.xpose.msra.mxu0 0.0
        %930 = vmatprep.subr.mxu0 0.0
        %931 = vmatpush1.xpose.msra.mxu0 0.0
        %932 = vmatprep.subr.mxu0 0.0
        %933 = vmatpush1.xpose.msra.mxu0 0.0
        %934 = vmatprep.subr.mxu0 0.0
        %935 = vmatpush1.xpose.msra.mxu0 0.0
        %936 = vmatprep.subr.mxu0 0.0
        %937 = vmatpush1.xpose.msra.mxu0 0.0
        %938 = vmatprep.subr.mxu0 0.0
        %939 = vmatpush1.xpose.msra.mxu0 0.0
        %940 = vmatprep.subr.mxu0 0.0
        %941 = vmatpush1.xpose.msra.mxu0 0.0
        %942 = vmatprep.subr.mxu0 0.0
        %943 = vmatpush1.xpose.msra.mxu0 0.0
        %944 = vmatprep.subr.mxu0 0.0
        %945 = vmatpush1.xpose.msra.mxu0 0.0
        %946 = vmatprep.subr.mxu0 0.0
        %947 = vmatpush1.xpose.msra.mxu0 0.0
        %948 = vmatprep.subr.mxu0 0.0
        %949 = vmatpush1.xpose.msra.mxu0 0.0
        %950 = vmatprep.subr.mxu0 0.0
        %951 = vmatpush1.xpose.msra.mxu0 0.0
        %952 = vmatprep.subr.mxu0 0.0
        %953 = vmatpush1.xpose.msra.mxu0 %v920
        %954 = vmatprep.subr.mxu0 0.0
        %955 = vmatpush2.xpose.msra.mxu0 0.0
        %956 = vmatprep.subr.mxu0 0.0
        %957 = vmatpush2.xpose.msra.mxu0 0.0
        %958 = vmatprep.subr.mxu0 0.0
        %959 = vmatpush2.xpose.msra.mxu0 0.0
        %960 = vmatprep.subr.mxu0 0.0
        %961 = vmatpush2.xpose.msra.mxu0 0.0
        %962 = vmatprep.subr.mxu0 0.0
        %963 = vmatpush2.xpose.msra.mxu0 0.0
        %964 = vmatprep.subr.mxu0 0.0
        %965 = vmatpush2.xpose.msra.mxu0 0.0
        %966 = vmatprep.subr.mxu0 0.0
        %967 = vmatpush2.xpose.msra.mxu0 0.0
        %968 = vmatprep.subr.mxu0 0.0
        %969 = vmatpush2.xpose.msra.mxu0 0.0
        %970 = vmatprep.subr.mxu0 0.0
        %971 = vmatpush2.xpose.msra.mxu0 0.0
        %972 = vmatprep.subr.mxu0 0.0
        %973 = vmatpush2.xpose.msra.mxu0 0.0
        %974 = vmatprep.subr.mxu0 0.0
        %975 = vmatpush2.xpose.msra.mxu0 0.0
        %976 = vmatprep.subr.mxu0 0.0
        %977 = vmatpush2.xpose.msra.mxu0 0.0
        %978 = vmatprep.subr.mxu0 0.0
        %979 = vmatpush2.xpose.msra.mxu0 0.0
        %980 = vmatprep.subr.mxu0 0.0
        %981 = vmatpush2.xpose.msra.mxu0 0.0
        %982 = vmatprep.subr.mxu0 0.0
        %983 = vmatpush2.xpose.msra.mxu0 0.0
        %984 = vmatprep.subr.mxu0 0.0
        %985 = vmatpush2.xpose.msra.mxu0 0.0
        %986 = vmatprep.mubr.f32.mxu0 0.0
        %987 = vmatmul.mubr.f32.gmra.mxu0 %v917
        %v988 = vpop.f32.mrf.mxu0
        %v989 = vadd.f32 %v913, %v988
        %v990 = vpop.f32.mrf.mxu0
        %991 = vdwg.mxu0
        %v992 = vsel %vm915, %v989, -inf
        %993 = vmax.xlane.f32.xlu0 %v992
        %v994 = vpop.xlane.xlu0 %993
        %v995 = vsub.f32 %v989, %v994
        %v996 = vmul.f32 %v995, 1.442695
        %v997 = vpow.pop %v996
        %v998 = vsel %vm915, %v997, 0.0
        %999 = vadd.xlane.f32.xlu0 %v998
        %v1000 = vpop.xlane.xlu0 %999
        %v1001 = vrcp.pop %v1000
        %v1002 = vmul.f32 %v997, %v1001
        %v1004 = vsel %vm915, %v1002, 0
        %1006 = vmatprep.subr.mxu0 0.0
        %1007 = vmatpush1.msra.mxu0 0.0
        %1008 = vmatprep.subr.mxu0 0.0
        %1009 = vmatpush1.msra.mxu0 0.0
        %1010 = vmatprep.subr.mxu0 0.0
        %1011 = vmatpush1.msra.mxu0 0.0
        %1012 = vmatprep.subr.mxu0 0.0
        %1013 = vmatpush1.msra.mxu0 0.0
        %1014 = vmatprep.subr.mxu0 0.0
        %1015 = vmatpush1.msra.mxu0 0.0
        %1016 = vmatprep.subr.mxu0 0.0
        %1017 = vmatpush1.msra.mxu0 0.0
        %1018 = vmatprep.subr.mxu0 0.0
        %1019 = vmatpush1.msra.mxu0 0.0
        %1020 = vmatprep.subr.mxu0 0.0
        %1021 = vmatpush1.msra.mxu0 0.0
        %1022 = vmatprep.subr.mxu0 0.0
        %1023 = vmatpush1.msra.mxu0 0.0
        %1024 = vmatprep.subr.mxu0 0.0
        %1025 = vmatpush1.msra.mxu0 0.0
        %1026 = vmatprep.subr.mxu0 0.0
        %1027 = vmatpush1.msra.mxu0 0.0
        %1028 = vmatprep.subr.mxu0 0.0
        %1029 = vmatpush1.msra.mxu0 0.0
        %1030 = vmatprep.subr.mxu0 0.0
        %1031 = vmatpush1.msra.mxu0 0.0
        %1032 = vmatprep.subr.mxu0 0.0
        %1033 = vmatpush1.msra.mxu0 0.0
        %1034 = vmatprep.subr.mxu0 0.0
        %1035 = vmatpush1.msra.mxu0 0.0
        %1036 = vmatprep.subr.mxu0 0.0
        %1037 = vmatpush1.msra.mxu0 %v908
        %1038 = vmatprep.subr.mxu0 0.0
        %1039 = vmatpush2.msra.mxu0 0.0
        %1040 = vmatprep.subr.mxu0 0.0
        %1041 = vmatpush2.msra.mxu0 0.0
        %1042 = vmatprep.subr.mxu0 0.0
        %1043 = vmatpush2.msra.mxu0 0.0
        %1044 = vmatprep.subr.mxu0 0.0
        %1045 = vmatpush2.msra.mxu0 0.0
        %1046 = vmatprep.subr.mxu0 0.0
        %1047 = vmatpush2.msra.mxu0 0.0
        %1048 = vmatprep.subr.mxu0 0.0
        %1049 = vmatpush2.msra.mxu0 0.0
        %1050 = vmatprep.subr.mxu0 0.0
        %1051 = vmatpush2.msra.mxu0 0.0
        %1052 = vmatprep.subr.mxu0 0.0
        %1053 = vmatpush2.msra.mxu0 0.0
        %1054 = vmatprep.subr.mxu0 0.0
        %1055 = vmatpush2.msra.mxu0 0.0
        %1056 = vmatprep.subr.mxu0 0.0
        %1057 = vmatpush2.msra.mxu0 0.0
        %1058 = vmatprep.subr.mxu0 0.0
        %1059 = vmatpush2.msra.mxu0 0.0
        %1060 = vmatprep.subr.mxu0 0.0
        %1061 = vmatpush2.msra.mxu0 0.0
        %1062 = vmatprep.subr.mxu0 0.0
        %1063 = vmatpush2.msra.mxu0 0.0
        %1064 = vmatprep.subr.mxu0 0.0
        %1065 = vmatpush2.msra.mxu0 0.0
        %1066 = vmatprep.subr.mxu0 0.0
        %1067 = vmatpush2.msra.mxu0 0.0
        %1068 = vmatprep.subr.mxu0 0.0
        %1069 = vmatpush2.msra.mxu0 0.0
        %1070 = vmatprep.mubr.f32.mxu0 0.0
        %1071 = vmatmul.mubr.f32.gmra.mxu0 %v1004
        %v1072 = vpop.f32.mrf.mxu0
        %v1073 = vadd.f32 0.0, %v1072
        %v1074 = vpop.f32.mrf.mxu0
        %1075 = vdwg.mxu0
        %v1076 = vld [vmem:[#allocation15] sm:$0xff]
        %1077 = vrot.lane.b32.xlu0 %v903, 120
        %v1078 = vpop.permute.xlu0 %1077
        %1079 = vrot.lane.b32.xlu0 %v907, 120
        %v1080 = vpop.permute.xlu0 %1079
        %v1081 = vsel %vm915, %v1078, 0
        %v1083 = vsel %vm915, %v1080, 0
        %1085 = vmatprep.subr.mxu0 0.0
        %1086 = vmatpush1.xpose.msra.mxu0 0.0
        %1087 = vmatprep.subr.mxu0 0.0
        %1088 = vmatpush1.xpose.msra.mxu0 0.0
        %1089 = vmatprep.subr.mxu0 0.0
        %1090 = vmatpush1.xpose.msra.mxu0 0.0
        %1091 = vmatprep.subr.mxu0 0.0
        %1092 = vmatpush1.xpose.msra.mxu0 0.0
        %1093 = vmatprep.subr.mxu0 0.0
        %1094 = vmatpush1.xpose.msra.mxu0 0.0
        %1095 = vmatprep.subr.mxu0 0.0
        %1096 = vmatpush1.xpose.msra.mxu0 0.0
        %1097 = vmatprep.subr.mxu0 0.0
        %1098 = vmatpush1.xpose.msra.mxu0 0.0
        %1099 = vmatprep.subr.mxu0 0.0
        %1100 = vmatpush1.xpose.msra.mxu0 0.0
        %1101 = vmatprep.subr.mxu0 0.0
        %1102 = vmatpush1.xpose.msra.mxu0 0.0
        %1103 = vmatprep.subr.mxu0 0.0
        %1104 = vmatpush1.xpose.msra.mxu0 0.0
        %1105 = vmatprep.subr.mxu0 0.0
        %1106 = vmatpush1.xpose.msra.mxu0 0.0
        %1107 = vmatprep.subr.mxu0 0.0
        %1108 = vmatpush1.xpose.msra.mxu0 0.0
        %1109 = vmatprep.subr.mxu0 0.0
        %1110 = vmatpush1.xpose.msra.mxu0 0.0
        %1111 = vmatprep.subr.mxu0 0.0
        %1112 = vmatpush1.xpose.msra.mxu0 0.0
        %1113 = vmatprep.subr.mxu0 0.0
        %1114 = vmatpush1.xpose.msra.mxu0 0.0
        %1115 = vmatprep.subr.mxu0 0.0
        %1116 = vmatpush1.xpose.msra.mxu0 %v1083
        %1117 = vmatprep.subr.mxu0 0.0
        %1118 = vmatpush2.xpose.msra.mxu0 0.0
        %1119 = vmatprep.subr.mxu0 0.0
        %1120 = vmatpush2.xpose.msra.mxu0 0.0
        %1121 = vmatprep.subr.mxu0 0.0
        %1122 = vmatpush2.xpose.msra.mxu0 0.0
        %1123 = vmatprep.subr.mxu0 0.0
        %1124 = vmatpush2.xpose.msra.mxu0 0.0
        %1125 = vmatprep.subr.mxu0 0.0
        %1126 = vmatpush2.xpose.msra.mxu0 0.0
        %1127 = vmatprep.subr.mxu0 0.0
        %1128 = vmatpush2.xpose.msra.mxu0 0.0
        %1129 = vmatprep.subr.mxu0 0.0
        %1130 = vmatpush2.xpose.msra.mxu0 0.0
        %1131 = vmatprep.subr.mxu0 0.0
        %1132 = vmatpush2.xpose.msra.mxu0 0.0
        %1133 = vmatprep.subr.mxu0 0.0
        %1134 = vmatpush2.xpose.msra.mxu0 0.0
        %1135 = vmatprep.subr.mxu0 0.0
        %1136 = vmatpush2.xpose.msra.mxu0 0.0
        %1137 = vmatprep.subr.mxu0 0.0
        %1138 = vmatpush2.xpose.msra.mxu0 0.0
        %1139 = vmatprep.subr.mxu0 0.0
        %1140 = vmatpush2.xpose.msra.mxu0 0.0
        %1141 = vmatprep.subr.mxu0 0.0
        %1142 = vmatpush2.xpose.msra.mxu0 0.0
        %1143 = vmatprep.subr.mxu0 0.0
        %1144 = vmatpush2.xpose.msra.mxu0 0.0
        %1145 = vmatprep.subr.mxu0 0.0
        %1146 = vmatpush2.xpose.msra.mxu0 0.0
        %1147 = vmatprep.subr.mxu0 0.0
        %1148 = vmatpush2.xpose.msra.mxu0 0.0
        %1149 = vmatprep.mubr.f32.mxu0 0.0
        %1150 = vmatmul.mubr.f32.gmra.mxu0 %v1081
        %v1151 = vpop.f32.mrf.mxu0
        %v1152 = vadd.f32 %v913, %v1151
        %v1153 = vpop.f32.mrf.mxu0
        %1154 = vdwg.mxu0
        %v1155 = vsel %vm915, %v1152, -inf
        %1156 = vmax.xlane.f32.xlu0 %v1155
        %v1157 = vpop.xlane.xlu0 %1156
        %v1158 = vsub.f32 %v1152, %v1157
        %v1159 = vmul.f32 %v1158, 1.442695
        %v1160 = vpow.pop %v1159
        %v1161 = vsel %vm915, %v1160, 0.0
        %1162 = vadd.xlane.f32.xlu0 %v1161
        %v1163 = vpop.xlane.xlu0 %1162
        %v1164 = vrcp.pop %v1163
        %v1165 = vmul.f32 %v1160, %v1164
        %1167 = vrot.lane.b32.xlu0 %v908, 120
        %v1168 = vpop.permute.xlu0 %1167
        %v1171 = vsel %vm915, %v1165, 0
        %1173 = vmatprep.subr.mxu0 0.0
        %1174 = vmatpush1.msra.mxu0 0.0
        %1175 = vmatprep.subr.mxu0 0.0
        %1176 = vmatpush1.msra.mxu0 0.0
        %1177 = vmatprep.subr.mxu0 0.0
        %1178 = vmatpush1.msra.mxu0 0.0
        %1179 = vmatprep.subr.mxu0 0.0
        %1180 = vmatpush1.msra.mxu0 0.0
        %1181 = vmatprep.subr.mxu0 0.0
        %1182 = vmatpush1.msra.mxu0 0.0
        %1183 = vmatprep.subr.mxu0 0.0
        %1184 = vmatpush1.msra.mxu0 0.0
        %1185 = vmatprep.subr.mxu0 0.0
        %1186 = vmatpush1.msra.mxu0 0.0
        %1187 = vmatprep.subr.mxu0 0.0
        %1188 = vmatpush1.msra.mxu0 0.0
        %1189 = vmatprep.subr.mxu0 0.0
        %1190 = vmatpush1.msra.mxu0 0.0
        %1191 = vmatprep.subr.mxu0 0.0
        %1192 = vmatpush1.msra.mxu0 0.0
        %1193 = vmatprep.subr.mxu0 0.0
        %1194 = vmatpush1.msra.mxu0 0.0
        %1195 = vmatprep.subr.mxu0 0.0
        %1196 = vmatpush1.msra.mxu0 0.0
        %1197 = vmatprep.subr.mxu0 0.0
        %1198 = vmatpush1.msra.mxu0 0.0
        %1199 = vmatprep.subr.mxu0 0.0
        %1200 = vmatpush1.msra.mxu0 0.0
        %1201 = vmatprep.subr.mxu0 0.0
        %1202 = vmatpush1.msra.mxu0 0.0
        %1203 = vmatprep.subr.mxu0 0.0
        %1204 = vmatpush1.msra.mxu0 %v1168
        %1205 = vmatprep.subr.mxu0 0.0
        %1206 = vmatpush2.msra.mxu0 0.0
        %1207 = vmatprep.subr.mxu0 0.0
        %1208 = vmatpush2.msra.mxu0 0.0
        %1209 = vmatprep.subr.mxu0 0.0
        %1210 = vmatpush2.msra.mxu0 0.0
        %1211 = vmatprep.subr.mxu0 0.0
        %1212 = vmatpush2.msra.mxu0 0.0
        %1213 = vmatprep.subr.mxu0 0.0
        %1214 = vmatpush2.msra.mxu0 0.0
        %1215 = vmatprep.subr.mxu0 0.0
        %1216 = vmatpush2.msra.mxu0 0.0
        %1217 = vmatprep.subr.mxu0 0.0
        %1218 = vmatpush2.msra.mxu0 0.0
        %1219 = vmatprep.subr.mxu0 0.0
        %1220 = vmatpush2.msra.mxu0 0.0
        %1221 = vmatprep.subr.mxu0 0.0
        %1222 = vmatpush2.msra.mxu0 0.0
        %1223 = vmatprep.subr.mxu0 0.0
        %1224 = vmatpush2.msra.mxu0 0.0
        %1225 = vmatprep.subr.mxu0 0.0
        %1226 = vmatpush2.msra.mxu0 0.0
        %1227 = vmatprep.subr.mxu0 0.0
        %1228 = vmatpush2.msra.mxu0 0.0
        %1229 = vmatprep.subr.mxu0 0.0
        %1230 = vmatpush2.msra.mxu0 0.0
        %1231 = vmatprep.subr.mxu0 0.0
        %1232 = vmatpush2.msra.mxu0 0.0
        %1233 = vmatprep.subr.mxu0 0.0
        %1234 = vmatpush2.msra.mxu0 0.0
        %1235 = vmatprep.subr.mxu0 0.0
        %1236 = vmatpush2.msra.mxu0 0.0
        %1237 = vmatprep.mubr.f32.mxu0 0.0
        %1238 = vmatmul.mubr.f32.gmra.mxu0 %v1171
        %v1239 = vpop.f32.mrf.mxu0
        %v1240 = vadd.f32 0.0, %v1239
        %v1241 = vpop.f32.mrf.mxu0
        %1242 = vdwg.mxu0
        %v1243 = vld [vmem:[#allocation15 + $0x8] sm:$0xff]
        %v1245 = vsel %vm915, %v1240, 0
        %1247 = vmatprep.subr.mxu0 0.0
        %1248 = vmatpush1.msra.mxu0 0.0
        %1249 = vmatprep.subr.mxu0 0.0
        %1250 = vmatpush1.msra.mxu0 0.0
        %1251 = vmatprep.subr.mxu0 0.0
        %1252 = vmatpush1.msra.mxu0 0.0
        %1253 = vmatprep.subr.mxu0 0.0
        %1254 = vmatpush1.msra.mxu0 0.0
        %1255 = vmatprep.subr.mxu0 0.0
        %1256 = vmatpush1.msra.mxu0 0.0
        %1257 = vmatprep.subr.mxu0 0.0
        %1258 = vmatpush1.msra.mxu0 0.0
        %1259 = vmatprep.subr.mxu0 0.0
        %1260 = vmatpush1.msra.mxu0 0.0
        %1261 = vmatprep.subr.mxu0 0.0
        %1262 = vmatpush1.msra.mxu0 0.0
        %1263 = vmatprep.subr.mxu0 0.0
        %1264 = vmatpush1.msra.mxu0 0.0
        %1265 = vmatprep.subr.mxu0 0.0
        %1266 = vmatpush1.msra.mxu0 0.0
        %1267 = vmatprep.subr.mxu0 0.0
        %1268 = vmatpush1.msra.mxu0 0.0
        %1269 = vmatprep.subr.mxu0 0.0
        %1270 = vmatpush1.msra.mxu0 0.0
        %1271 = vmatprep.subr.mxu0 0.0
        %1272 = vmatpush1.msra.mxu0 0.0
        %1273 = vmatprep.subr.mxu0 0.0
        %1274 = vmatpush1.msra.mxu0 0.0
        %1275 = vmatprep.subr.mxu0 0.0
        %1276 = vmatpush1.msra.mxu0 0.0
        %1277 = vmatprep.subr.mxu0 0.0
        %1278 = vmatpush1.msra.mxu0 %v1243
        %1279 = vmatprep.subr.mxu0 0.0
        %1280 = vmatpush2.msra.mxu0 0.0
        %1281 = vmatprep.subr.mxu0 0.0
        %1282 = vmatpush2.msra.mxu0 0.0
        %1283 = vmatprep.subr.mxu0 0.0
        %1284 = vmatpush2.msra.mxu0 0.0
        %1285 = vmatprep.subr.mxu0 0.0
        %1286 = vmatpush2.msra.mxu0 0.0
        %1287 = vmatprep.subr.mxu0 0.0
        %1288 = vmatpush2.msra.mxu0 0.0
        %1289 = vmatprep.subr.mxu0 0.0
        %1290 = vmatpush2.msra.mxu0 0.0
        %1291 = vmatprep.subr.mxu0 0.0
        %1292 = vmatpush2.msra.mxu0 0.0
        %1293 = vmatprep.subr.mxu0 0.0
        %1294 = vmatpush2.msra.mxu0 0.0
        %1295 = vmatprep.subr.mxu0 0.0
        %1296 = vmatpush2.msra.mxu0 0.0
        %1297 = vmatprep.subr.mxu0 0.0
        %1298 = vmatpush2.msra.mxu0 0.0
        %1299 = vmatprep.subr.mxu0 0.0
        %1300 = vmatpush2.msra.mxu0 0.0
        %1301 = vmatprep.subr.mxu0 0.0
        %1302 = vmatpush2.msra.mxu0 0.0
        %1303 = vmatprep.subr.mxu0 0.0
        %1304 = vmatpush2.msra.mxu0 0.0
        %1305 = vmatprep.subr.mxu0 0.0
        %1306 = vmatpush2.msra.mxu0 0.0
        %1307 = vmatprep.subr.mxu0 0.0
        %1308 = vmatpush2.msra.mxu0 0.0
        %1309 = vmatprep.subr.mxu0 0.0
        %1310 = vmatpush2.msra.mxu0 0.0
        %1311 = vmatprep.mubr.f32.mxu0 0.0
        %1312 = vmatmul.mubr.f32.gmra.mxu0 %v1245
        %v1313 = vpop.f32.mrf.mxu0
        %v1314 = vadd.f32 0.0, %v1313
        %v1315 = vpop.f32.mrf.mxu0
        %1316 = vdwg.mxu0
        %v1318 = vsel %vm915, %v1073, 0
        %1320 = vmatprep.subr.mxu0 0.0
        %1321 = vmatpush1.msra.mxu0 0.0
        %1322 = vmatprep.subr.mxu0 0.0
        %1323 = vmatpush1.msra.mxu0 0.0
        %1324 = vmatprep.subr.mxu0 0.0
        %1325 = vmatpush1.msra.mxu0 0.0
        %1326 = vmatprep.subr.mxu0 0.0
        %1327 = vmatpush1.msra.mxu0 0.0
        %1328 = vmatprep.subr.mxu0 0.0
        %1329 = vmatpush1.msra.mxu0 0.0
        %1330 = vmatprep.subr.mxu0 0.0
        %1331 = vmatpush1.msra.mxu0 0.0
        %1332 = vmatprep.subr.mxu0 0.0
        %1333 = vmatpush1.msra.mxu0 0.0
        %1334 = vmatprep.subr.mxu0 0.0
        %1335 = vmatpush1.msra.mxu0 0.0
        %1336 = vmatprep.subr.mxu0 0.0
        %1337 = vmatpush1.msra.mxu0 0.0
        %1338 = vmatprep.subr.mxu0 0.0
        %1339 = vmatpush1.msra.mxu0 0.0
        %1340 = vmatprep.subr.mxu0 0.0
        %1341 = vmatpush1.msra.mxu0 0.0
        %1342 = vmatprep.subr.mxu0 0.0
        %1343 = vmatpush1.msra.mxu0 0.0
        %1344 = vmatprep.subr.mxu0 0.0
        %1345 = vmatpush1.msra.mxu0 0.0
        %1346 = vmatprep.subr.mxu0 0.0
        %1347 = vmatpush1.msra.mxu0 0.0
        %1348 = vmatprep.subr.mxu0 0.0
        %1349 = vmatpush1.msra.mxu0 0.0
        %1350 = vmatprep.subr.mxu0 0.0
        %1351 = vmatpush1.msra.mxu0 %v1076
        %1352 = vmatprep.subr.mxu0 0.0
        %1353 = vmatpush2.msra.mxu0 0.0
        %1354 = vmatprep.subr.mxu0 0.0
        %1355 = vmatpush2.msra.mxu0 0.0
        %1356 = vmatprep.subr.mxu0 0.0
        %1357 = vmatpush2.msra.mxu0 0.0
        %1358 = vmatprep.subr.mxu0 0.0
        %1359 = vmatpush2.msra.mxu0 0.0
        %1360 = vmatprep.subr.mxu0 0.0
        %1361 = vmatpush2.msra.mxu0 0.0
        %1362 = vmatprep.subr.mxu0 0.0
        %1363 = vmatpush2.msra.mxu0 0.0
        %1364 = vmatprep.subr.mxu0 0.0
        %1365 = vmatpush2.msra.mxu0 0.0
        %1366 = vmatprep.subr.mxu0 0.0
        %1367 = vmatpush2.msra.mxu0 0.0
        %1368 = vmatprep.subr.mxu0 0.0
        %1369 = vmatpush2.msra.mxu0 0.0
        %1370 = vmatprep.subr.mxu0 0.0
        %1371 = vmatpush2.msra.mxu0 0.0
        %1372 = vmatprep.subr.mxu0 0.0
        %1373 = vmatpush2.msra.mxu0 0.0
        %1374 = vmatprep.subr.mxu0 0.0
        %1375 = vmatpush2.msra.mxu0 0.0
        %1376 = vmatprep.subr.mxu0 0.0
        %1377 = vmatpush2.msra.mxu0 0.0
        %1378 = vmatprep.subr.mxu0 0.0
        %1379 = vmatpush2.msra.mxu0 0.0
        %1380 = vmatprep.subr.mxu0 0.0
        %1381 = vmatpush2.msra.mxu0 0.0
        %1382 = vmatprep.subr.mxu0 0.0
        %1383 = vmatpush2.msra.mxu0 0.0
        %1384 = vmatprep.mubr.f32.mxu0 0.0
        %1385 = vmatmul.mubr.f32.gmra.mxu0 %v1318
        %v1386 = vpop.f32.mrf.mxu0
        %v1387 = vadd.f32 %v1314, %v1386
        %v1388 = vpop.f32.mrf.mxu0
        %1389 = vdwg.mxu0
        %1390 = vrot.lane.b32.xlu0 %v903, 112
        %v1391 = vpop.permute.xlu0 %1390
        %1392 = vrot.lane.b32.xlu0 %v907, 112
        %v1393 = vpop.permute.xlu0 %1392
        %v1394 = vsel %vm915, %v1391, 0
        %v1396 = vsel %vm915, %v1393, 0
        %1398 = vmatprep.subr.mxu0 0.0
        %1399 = vmatpush1.xpose.msra.mxu0 0.0
        %1400 = vmatprep.subr.mxu0 0.0
        %1401 = vmatpush1.xpose.msra.mxu0 0.0
        %1402 = vmatprep.subr.mxu0 0.0
        %1403 = vmatpush1.xpose.msra.mxu0 0.0
        %1404 = vmatprep.subr.mxu0 0.0
        %1405 = vmatpush1.xpose.msra.mxu0 0.0
        %1406 = vmatprep.subr.mxu0 0.0
        %1407 = vmatpush1.xpose.msra.mxu0 0.0
        %1408 = vmatprep.subr.mxu0 0.0
        %1409 = vmatpush1.xpose.msra.mxu0 0.0
        %1410 = vmatprep.subr.mxu0 0.0
        %1411 = vmatpush1.xpose.msra.mxu0 0.0
        %1412 = vmatprep.subr.mxu0 0.0
        %1413 = vmatpush1.xpose.msra.mxu0 0.0
        %1414 = vmatprep.subr.mxu0 0.0
        %1415 = vmatpush1.xpose.msra.mxu0 0.0
        %1416 = vmatprep.subr.mxu0 0.0
        %1417 = vmatpush1.xpose.msra.mxu0 0.0
        %1418 = vmatprep.subr.mxu0 0.0
        %1419 = vmatpush1.xpose.msra.mxu0 0.0
        %1420 = vmatprep.subr.mxu0 0.0
        %1421 = vmatpush1.xpose.msra.mxu0 0.0
        %1422 = vmatprep.subr.mxu0 0.0
        %1423 = vmatpush1.xpose.msra.mxu0 0.0
        %1424 = vmatprep.subr.mxu0 0.0
        %1425 = vmatpush1.xpose.msra.mxu0 0.0
        %1426 = vmatprep.subr.mxu0 0.0
        %1427 = vmatpush1.xpose.msra.mxu0 0.0
        %1428 = vmatprep.subr.mxu0 0.0
        %1429 = vmatpush1.xpose.msra.mxu0 %v1396
        %1430 = vmatprep.subr.mxu0 0.0
        %1431 = vmatpush2.xpose.msra.mxu0 0.0
        %1432 = vmatprep.subr.mxu0 0.0
        %1433 = vmatpush2.xpose.msra.mxu0 0.0
        %1434 = vmatprep.subr.mxu0 0.0
        %1435 = vmatpush2.xpose.msra.mxu0 0.0
        %1436 = vmatprep.subr.mxu0 0.0
        %1437 = vmatpush2.xpose.msra.mxu0 0.0
        %1438 = vmatprep.subr.mxu0 0.0
        %1439 = vmatpush2.xpose.msra.mxu0 0.0
        %1440 = vmatprep.subr.mxu0 0.0
        %1441 = vmatpush2.xpose.msra.mxu0 0.0
        %1442 = vmatprep.subr.mxu0 0.0
        %1443 = vmatpush2.xpose.msra.mxu0 0.0
        %1444 = vmatprep.subr.mxu0 0.0
        %1445 = vmatpush2.xpose.msra.mxu0 0.0
        %1446 = vmatprep.subr.mxu0 0.0
        %1447 = vmatpush2.xpose.msra.mxu0 0.0
        %1448 = vmatprep.subr.mxu0 0.0
        %1449 = vmatpush2.xpose.msra.mxu0 0.0
        %1450 = vmatprep.subr.mxu0 0.0
        %1451 = vmatpush2.xpose.msra.mxu0 0.0
        %1452 = vmatprep.subr.mxu0 0.0
        %1453 = vmatpush2.xpose.msra.mxu0 0.0
        %1454 = vmatprep.subr.mxu0 0.0
        %1455 = vmatpush2.xpose.msra.mxu0 0.0
        %1456 = vmatprep.subr.mxu0 0.0
        %1457 = vmatpush2.xpose.msra.mxu0 0.0
        %1458 = vmatprep.subr.mxu0 0.0
        %1459 = vmatpush2.xpose.msra.mxu0 0.0
        %1460 = vmatprep.subr.mxu0 0.0
        %1461 = vmatpush2.xpose.msra.mxu0 0.0
        %1462 = vmatprep.mubr.f32.mxu0 0.0
        %1463 = vmatmul.mubr.f32.gmra.mxu0 %v1394
        %v1464 = vpop.f32.mrf.mxu0
        %v1465 = vadd.f32 %v913, %v1464
        %v1466 = vpop.f32.mrf.mxu0
        %1467 = vdwg.mxu0
        %v1468 = vsel %vm915, %v1465, -inf
        %1469 = vmax.xlane.f32.xlu0 %v1468
        %v1470 = vpop.xlane.xlu0 %1469
        %v1471 = vsub.f32 %v1465, %v1470
        %v1472 = vmul.f32 %v1471, 1.442695
        %v1473 = vpow.pop %v1472
        %v1474 = vsel %vm915, %v1473, 0.0
        %1475 = vadd.xlane.f32.xlu0 %v1474
        %v1476 = vpop.xlane.xlu0 %1475
        %v1477 = vrcp.pop %v1476
        %v1478 = vmul.f32 %v1473, %v1477
        %1479 = vrot.lane.b32.xlu0 %v908, 112
        %v1480 = vpop.permute.xlu0 %1479
        %v1483 = vsel %vm915, %v1478, 0
        %1485 = vmatprep.subr.mxu0 0.0
        %1486 = vmatpush1.msra.mxu0 0.0
        %1487 = vmatprep.subr.mxu0 0.0
        %1488 = vmatpush1.msra.mxu0 0.0
        %1489 = vmatprep.subr.mxu0 0.0
        %1490 = vmatpush1.msra.mxu0 0.0
        %1491 = vmatprep.subr.mxu0 0.0
        %1492 = vmatpush1.msra.mxu0 0.0
        %1493 = vmatprep.subr.mxu0 0.0
        %1494 = vmatpush1.msra.mxu0 0.0
        %1495 = vmatprep.subr.mxu0 0.0
        %1496 = vmatpush1.msra.mxu0 0.0
        %1497 = vmatprep.subr.mxu0 0.0
        %1498 = vmatpush1.msra.mxu0 0.0
        %1499 = vmatprep.subr.mxu0 0.0
        %1500 = vmatpush1.msra.mxu0 0.0
        %1501 = vmatprep.subr.mxu0 0.0
        %1502 = vmatpush1.msra.mxu0 0.0
        %1503 = vmatprep.subr.mxu0 0.0
        %1504 = vmatpush1.msra.mxu0 0.0
        %1505 = vmatprep.subr.mxu0 0.0
        %1506 = vmatpush1.msra.mxu0 0.0
        %1507 = vmatprep.subr.mxu0 0.0
        %1508 = vmatpush1.msra.mxu0 0.0
        %1509 = vmatprep.subr.mxu0 0.0
        %1510 = vmatpush1.msra.mxu0 0.0
        %1511 = vmatprep.subr.mxu0 0.0
        %1512 = vmatpush1.msra.mxu0 0.0
        %1513 = vmatprep.subr.mxu0 0.0
        %1514 = vmatpush1.msra.mxu0 0.0
        %1515 = vmatprep.subr.mxu0 0.0
        %1516 = vmatpush1.msra.mxu0 %v1480
        %1517 = vmatprep.subr.mxu0 0.0
        %1518 = vmatpush2.msra.mxu0 0.0
        %1519 = vmatprep.subr.mxu0 0.0
        %1520 = vmatpush2.msra.mxu0 0.0
        %1521 = vmatprep.subr.mxu0 0.0
        %1522 = vmatpush2.msra.mxu0 0.0
        %1523 = vmatprep.subr.mxu0 0.0
        %1524 = vmatpush2.msra.mxu0 0.0
        %1525 = vmatprep.subr.mxu0 0.0
        %1526 = vmatpush2.msra.mxu0 0.0
        %1527 = vmatprep.subr.mxu0 0.0
        %1528 = vmatpush2.msra.mxu0 0.0
        %1529 = vmatprep.subr.mxu0 0.0
        %1530 = vmatpush2.msra.mxu0 0.0
        %1531 = vmatprep.subr.mxu0 0.0
        %1532 = vmatpush2.msra.mxu0 0.0
        %1533 = vmatprep.subr.mxu0 0.0
        %1534 = vmatpush2.msra.mxu0 0.0
        %1535 = vmatprep.subr.mxu0 0.0
        %1536 = vmatpush2.msra.mxu0 0.0
        %1537 = vmatprep.subr.mxu0 0.0
        %1538 = vmatpush2.msra.mxu0 0.0
        %1539 = vmatprep.subr.mxu0 0.0
        %1540 = vmatpush2.msra.mxu0 0.0
        %1541 = vmatprep.subr.mxu0 0.0
        %1542 = vmatpush2.msra.mxu0 0.0
        %1543 = vmatprep.subr.mxu0 0.0
        %1544 = vmatpush2.msra.mxu0 0.0
        %1545 = vmatprep.subr.mxu0 0.0
        %1546 = vmatpush2.msra.mxu0 0.0
        %1547 = vmatprep.subr.mxu0 0.0
        %1548 = vmatpush2.msra.mxu0 0.0
        %1549 = vmatprep.mubr.f32.mxu0 0.0
        %1550 = vmatmul.mubr.f32.gmra.mxu0 %v1483
        %v1551 = vpop.f32.mrf.mxu0
        %v1552 = vadd.f32 0.0, %v1551
        %v1553 = vpop.f32.mrf.mxu0
        %1554 = vdwg.mxu0
        %v1555 = vld [vmem:[#allocation15 + $0x10] sm:$0xff]
        %v1557 = vsel %vm915, %v1552, 0
        %1559 = vmatprep.subr.mxu0 0.0
        %1560 = vmatpush1.msra.mxu0 0.0
        %1561 = vmatprep.subr.mxu0 0.0
        %1562 = vmatpush1.msra.mxu0 0.0
        %1563 = vmatprep.subr.mxu0 0.0
        %1564 = vmatpush1.msra.mxu0 0.0
        %1565 = vmatprep.subr.mxu0 0.0
        %1566 = vmatpush1.msra.mxu0 0.0
        %1567 = vmatprep.subr.mxu0 0.0
        %1568 = vmatpush1.msra.mxu0 0.0
        %1569 = vmatprep.subr.mxu0 0.0
        %1570 = vmatpush1.msra.mxu0 0.0
        %1571 = vmatprep.subr.mxu0 0.0
        %1572 = vmatpush1.msra.mxu0 0.0
        %1573 = vmatprep.subr.mxu0 0.0
        %1574 = vmatpush1.msra.mxu0 0.0
        %1575 = vmatprep.subr.mxu0 0.0
        %1576 = vmatpush1.msra.mxu0 0.0
        %1577 = vmatprep.subr.mxu0 0.0
        %1578 = vmatpush1.msra.mxu0 0.0
        %1579 = vmatprep.subr.mxu0 0.0
        %1580 = vmatpush1.msra.mxu0 0.0
        %1581 = vmatprep.subr.mxu0 0.0
        %1582 = vmatpush1.msra.mxu0 0.0
        %1583 = vmatprep.subr.mxu0 0.0
        %1584 = vmatpush1.msra.mxu0 0.0
        %1585 = vmatprep.subr.mxu0 0.0
        %1586 = vmatpush1.msra.mxu0 0.0
        %1587 = vmatprep.subr.mxu0 0.0
        %1588 = vmatpush1.msra.mxu0 0.0
        %1589 = vmatprep.subr.mxu0 0.0
        %1590 = vmatpush1.msra.mxu0 %v1555
        %1591 = vmatprep.subr.mxu0 0.0
        %1592 = vmatpush2.msra.mxu0 0.0
        %1593 = vmatprep.subr.mxu0 0.0
        %1594 = vmatpush2.msra.mxu0 0.0
        %1595 = vmatprep.subr.mxu0 0.0
        %1596 = vmatpush2.msra.mxu0 0.0
        %1597 = vmatprep.subr.mxu0 0.0
        %1598 = vmatpush2.msra.mxu0 0.0
        %1599 = vmatprep.subr.mxu0 0.0
        %1600 = vmatpush2.msra.mxu0 0.0
        %1601 = vmatprep.subr.mxu0 0.0
        %1602 = vmatpush2.msra.mxu0 0.0
        %1603 = vmatprep.subr.mxu0 0.0
        %1604 = vmatpush2.msra.mxu0 0.0
        %1605 = vmatprep.subr.mxu0 0.0
        %1606 = vmatpush2.msra.mxu0 0.0
        %1607 = vmatprep.subr.mxu0 0.0
        %1608 = vmatpush2.msra.mxu0 0.0
        %1609 = vmatprep.subr.mxu0 0.0
        %1610 = vmatpush2.msra.mxu0 0.0
        %1611 = vmatprep.subr.mxu0 0.0
        %1612 = vmatpush2.msra.mxu0 0.0
        %1613 = vmatprep.subr.mxu0 0.0
        %1614 = vmatpush2.msra.mxu0 0.0
        %1615 = vmatprep.subr.mxu0 0.0
        %1616 = vmatpush2.msra.mxu0 0.0
        %1617 = vmatprep.subr.mxu0 0.0
        %1618 = vmatpush2.msra.mxu0 0.0
        %1619 = vmatprep.subr.mxu0 0.0
        %1620 = vmatpush2.msra.mxu0 0.0
        %1621 = vmatprep.subr.mxu0 0.0
        %1622 = vmatpush2.msra.mxu0 0.0
        %1623 = vmatprep.mubr.f32.mxu0 0.0
        %1624 = vmatmul.mubr.f32.gmra.mxu0 %v1557
        %v1625 = vpop.f32.mrf.mxu0
        %v1626 = vadd.f32 0.0, %v1625
        %v1627 = vpop.f32.mrf.mxu0
        %1628 = vdwg.mxu0
        %v1629 = vadd.f32 %v1387, %v1626
        %1630 = vrot.lane.b32.xlu0 %v903, 104
        %v1631 = vpop.permute.xlu0 %1630
        %1632 = vrot.lane.b32.xlu0 %v907, 104
        %v1633 = vpop.permute.xlu0 %1632
        %v1634 = vsel %vm915, %v1631, 0
        %v1636 = vsel %vm915, %v1633, 0
        %1638 = vmatprep.subr.mxu0 0.0
        %1639 = vmatpush1.xpose.msra.mxu0 0.0
        %1640 = vmatprep.subr.mxu0 0.0
        %1641 = vmatpush1.xpose.msra.mxu0 0.0
        %1642 = vmatprep.subr.mxu0 0.0
        %1643 = vmatpush1.xpose.msra.mxu0 0.0
        %1644 = vmatprep.subr.mxu0 0.0
        %1645 = vmatpush1.xpose.msra.mxu0 0.0
        %1646 = vmatprep.subr.mxu0 0.0
        %1647 = vmatpush1.xpose.msra.mxu0 0.0
        %1648 = vmatprep.subr.mxu0 0.0
        %1649 = vmatpush1.xpose.msra.mxu0 0.0
        %1650 = vmatprep.subr.mxu0 0.0
        %1651 = vmatpush1.xpose.msra.mxu0 0.0
        %1652 = vmatprep.subr.mxu0 0.0
        %1653 = vmatpush1.xpose.msra.mxu0 0.0
        %1654 = vmatprep.subr.mxu0 0.0
        %1655 = vmatpush1.xpose.msra.mxu0 0.0
        %1656 = vmatprep.subr.mxu0 0.0
        %1657 = vmatpush1.xpose.msra.mxu0 0.0
        %1658 = vmatprep.subr.mxu0 0.0
        %1659 = vmatpush1.xpose.msra.mxu0 0.0
        %1660 = vmatprep.subr.mxu0 0.0
        %1661 = vmatpush1.xpose.msra.mxu0 0.0
        %1662 = vmatprep.subr.mxu0 0.0
        %1663 = vmatpush1.xpose.msra.mxu0 0.0
        %1664 = vmatprep.subr.mxu0 0.0
        %1665 = vmatpush1.xpose.msra.mxu0 0.0
        %1666 = vmatprep.subr.mxu0 0.0
        %1667 = vmatpush1.xpose.msra.mxu0 0.0
        %1668 = vmatprep.subr.mxu0 0.0
        %1669 = vmatpush1.xpose.msra.mxu0 %v1636
        %1670 = vmatprep.subr.mxu0 0.0
        %1671 = vmatpush2.xpose.msra.mxu0 0.0
        %1672 = vmatprep.subr.mxu0 0.0
        %1673 = vmatpush2.xpose.msra.mxu0 0.0
        %1674 = vmatprep.subr.mxu0 0.0
        %1675 = vmatpush2.xpose.msra.mxu0 0.0
        %1676 = vmatprep.subr.mxu0 0.0
        %1677 = vmatpush2.xpose.msra.mxu0 0.0
        %1678 = vmatprep.subr.mxu0 0.0
        %1679 = vmatpush2.xpose.msra.mxu0 0.0
        %1680 = vmatprep.subr.mxu0 0.0
        %1681 = vmatpush2.xpose.msra.mxu0 0.0
        %1682 = vmatprep.subr.mxu0 0.0
        %1683 = vmatpush2.xpose.msra.mxu0 0.0
        %1684 = vmatprep.subr.mxu0 0.0
        %1685 = vmatpush2.xpose.msra.mxu0 0.0
        %1686 = vmatprep.subr.mxu0 0.0
        %1687 = vmatpush2.xpose.msra.mxu0 0.0
        %1688 = vmatprep.subr.mxu0 0.0
        %1689 = vmatpush2.xpose.msra.mxu0 0.0
        %1690 = vmatprep.subr.mxu0 0.0
        %1691 = vmatpush2.xpose.msra.mxu0 0.0
        %1692 = vmatprep.subr.mxu0 0.0
        %1693 = vmatpush2.xpose.msra.mxu0 0.0
        %1694 = vmatprep.subr.mxu0 0.0
        %1695 = vmatpush2.xpose.msra.mxu0 0.0
        %1696 = vmatprep.subr.mxu0 0.0
        %1697 = vmatpush2.xpose.msra.mxu0 0.0
        %1698 = vmatprep.subr.mxu0 0.0
        %1699 = vmatpush2.xpose.msra.mxu0 0.0
        %1700 = vmatprep.subr.mxu0 0.0
        %1701 = vmatpush2.xpose.msra.mxu0 0.0
        %1702 = vmatprep.mubr.f32.mxu0 0.0
        %1703 = vmatmul.mubr.f32.gmra.mxu0 %v1634
        %v1704 = vpop.f32.mrf.mxu0
        %v1705 = vadd.f32 %v913, %v1704
        %v1706 = vpop.f32.mrf.mxu0
        %1707 = vdwg.mxu0
        %v1708 = vsel %vm915, %v1705, -inf
        %1709 = vmax.xlane.f32.xlu0 %v1708
        %v1710 = vpop.xlane.xlu0 %1709
        %v1711 = vsub.f32 %v1705, %v1710
        %v1712 = vmul.f32 %v1711, 1.442695
        %v1713 = vpow.pop %v1712
        %v1714 = vsel %vm915, %v1713, 0.0
        %1715 = vadd.xlane.f32.xlu0 %v1714
        %v1716 = vpop.xlane.xlu0 %1715
        %v1717 = vrcp.pop %v1716
        %v1718 = vmul.f32 %v1713, %v1717
        %1719 = vrot.lane.b32.xlu0 %v908, 104
        %v1720 = vpop.permute.xlu0 %1719
        %v1723 = vsel %vm915, %v1718, 0
        %1725 = vmatprep.subr.mxu0 0.0
        %1726 = vmatpush1.msra.mxu0 0.0
        %1727 = vmatprep.subr.mxu0 0.0
        %1728 = vmatpush1.msra.mxu0 0.0
        %1729 = vmatprep.subr.mxu0 0.0
        %1730 = vmatpush1.msra.mxu0 0.0
        %1731 = vmatprep.subr.mxu0 0.0
        %1732 = vmatpush1.msra.mxu0 0.0
        %1733 = vmatprep.subr.mxu0 0.0
        %1734 = vmatpush1.msra.mxu0 0.0
        %1735 = vmatprep.subr.mxu0 0.0
        %1736 = vmatpush1.msra.mxu0 0.0
        %1737 = vmatprep.subr.mxu0 0.0
        %1738 = vmatpush1.msra.mxu0 0.0
        %1739 = vmatprep.subr.mxu0 0.0
        %1740 = vmatpush1.msra.mxu0 0.0
        %1741 = vmatprep.subr.mxu0 0.0
        %1742 = vmatpush1.msra.mxu0 0.0
        %1743 = vmatprep.subr.mxu0 0.0
        %1744 = vmatpush1.msra.mxu0 0.0
        %1745 = vmatprep.subr.mxu0 0.0
        %1746 = vmatpush1.msra.mxu0 0.0
        %1747 = vmatprep.subr.mxu0 0.0
        %1748 = vmatpush1.msra.mxu0 0.0
        %1749 = vmatprep.subr.mxu0 0.0
        %1750 = vmatpush1.msra.mxu0 0.0
        %1751 = vmatprep.subr.mxu0 0.0
        %1752 = vmatpush1.msra.mxu0 0.0
        %1753 = vmatprep.subr.mxu0 0.0
        %1754 = vmatpush1.msra.mxu0 0.0
        %1755 = vmatprep.subr.mxu0 0.0
        %1756 = vmatpush1.msra.mxu0 %v1720
        %1757 = vmatprep.subr.mxu0 0.0
        %1758 = vmatpush2.msra.mxu0 0.0
        %1759 = vmatprep.subr.mxu0 0.0
        %1760 = vmatpush2.msra.mxu0 0.0
        %1761 = vmatprep.subr.mxu0 0.0
        %1762 = vmatpush2.msra.mxu0 0.0
        %1763 = vmatprep.subr.mxu0 0.0
        %1764 = vmatpush2.msra.mxu0 0.0
        %1765 = vmatprep.subr.mxu0 0.0
        %1766 = vmatpush2.msra.mxu0 0.0
        %1767 = vmatprep.subr.mxu0 0.0
        %1768 = vmatpush2.msra.mxu0 0.0
        %1769 = vmatprep.subr.mxu0 0.0
        %1770 = vmatpush2.msra.mxu0 0.0
        %1771 = vmatprep.subr.mxu0 0.0
        %1772 = vmatpush2.msra.mxu0 0.0
        %1773 = vmatprep.subr.mxu0 0.0
        %1774 = vmatpush2.msra.mxu0 0.0
        %1775 = vmatprep.subr.mxu0 0.0
        %1776 = vmatpush2.msra.mxu0 0.0
        %1777 = vmatprep.subr.mxu0 0.0
        %1778 = vmatpush2.msra.mxu0 0.0
        %1779 = vmatprep.subr.mxu0 0.0
        %1780 = vmatpush2.msra.mxu0 0.0
        %1781 = vmatprep.subr.mxu0 0.0
        %1782 = vmatpush2.msra.mxu0 0.0
        %1783 = vmatprep.subr.mxu0 0.0
        %1784 = vmatpush2.msra.mxu0 0.0
        %1785 = vmatprep.subr.mxu0 0.0
        %1786 = vmatpush2.msra.mxu0 0.0
        %1787 = vmatprep.subr.mxu0 0.0
        %1788 = vmatpush2.msra.mxu0 0.0
        %1789 = vmatprep.mubr.f32.mxu0 0.0
        %1790 = vmatmul.mubr.f32.gmra.mxu0 %v1723
        %v1791 = vpop.f32.mrf.mxu0
        %v1792 = vadd.f32 0.0, %v1791
        %v1793 = vpop.f32.mrf.mxu0
        %1794 = vdwg.mxu0
        %v1795 = vld [vmem:[#allocation15 + $0x18] sm:$0xff]
        %v1797 = vsel %vm915, %v1792, 0
        %1799 = vmatprep.subr.mxu0 0.0
        %1800 = vmatpush1.msra.mxu0 0.0
        %1801 = vmatprep.subr.mxu0 0.0
        %1802 = vmatpush1.msra.mxu0 0.0
        %1803 = vmatprep.subr.mxu0 0.0
        %1804 = vmatpush1.msra.mxu0 0.0
        %1805 = vmatprep.subr.mxu0 0.0
        %1806 = vmatpush1.msra.mxu0 0.0
        %1807 = vmatprep.subr.mxu0 0.0
        %1808 = vmatpush1.msra.mxu0 0.0
        %1809 = vmatprep.subr.mxu0 0.0
        %1810 = vmatpush1.msra.mxu0 0.0
        %1811 = vmatprep.subr.mxu0 0.0
        %1812 = vmatpush1.msra.mxu0 0.0
        %1813 = vmatprep.subr.mxu0 0.0
        %1814 = vmatpush1.msra.mxu0 0.0
        %1815 = vmatprep.subr.mxu0 0.0
        %1816 = vmatpush1.msra.mxu0 0.0
        %1817 = vmatprep.subr.mxu0 0.0
        %1818 = vmatpush1.msra.mxu0 0.0
        %1819 = vmatprep.subr.mxu0 0.0
        %1820 = vmatpush1.msra.mxu0 0.0
        %1821 = vmatprep.subr.mxu0 0.0
        %1822 = vmatpush1.msra.mxu0 0.0
        %1823 = vmatprep.subr.mxu0 0.0
        %1824 = vmatpush1.msra.mxu0 0.0
        %1825 = vmatprep.subr.mxu0 0.0
        %1826 = vmatpush1.msra.mxu0 0.0
        %1827 = vmatprep.subr.mxu0 0.0
        %1828 = vmatpush1.msra.mxu0 0.0
        %1829 = vmatprep.subr.mxu0 0.0
        %1830 = vmatpush1.msra.mxu0 %v1795
        %1831 = vmatprep.subr.mxu0 0.0
        %1832 = vmatpush2.msra.mxu0 0.0
        %1833 = vmatprep.subr.mxu0 0.0
        %1834 = vmatpush2.msra.mxu0 0.0
        %1835 = vmatprep.subr.mxu0 0.0
        %1836 = vmatpush2.msra.mxu0 0.0
        %1837 = vmatprep.subr.mxu0 0.0
        %1838 = vmatpush2.msra.mxu0 0.0
        %1839 = vmatprep.subr.mxu0 0.0
        %1840 = vmatpush2.msra.mxu0 0.0
        %1841 = vmatprep.subr.mxu0 0.0
        %1842 = vmatpush2.msra.mxu0 0.0
        %1843 = vmatprep.subr.mxu0 0.0
        %1844 = vmatpush2.msra.mxu0 0.0
        %1845 = vmatprep.subr.mxu0 0.0
        %1846 = vmatpush2.msra.mxu0 0.0
        %1847 = vmatprep.subr.mxu0 0.0
        %1848 = vmatpush2.msra.mxu0 0.0
        %1849 = vmatprep.subr.mxu0 0.0
        %1850 = vmatpush2.msra.mxu0 0.0
        %1851 = vmatprep.subr.mxu0 0.0
        %1852 = vmatpush2.msra.mxu0 0.0
        %1853 = vmatprep.subr.mxu0 0.0
        %1854 = vmatpush2.msra.mxu0 0.0
        %1855 = vmatprep.subr.mxu0 0.0
        %1856 = vmatpush2.msra.mxu0 0.0
        %1857 = vmatprep.subr.mxu0 0.0
        %1858 = vmatpush2.msra.mxu0 0.0
        %1859 = vmatprep.subr.mxu0 0.0
        %1860 = vmatpush2.msra.mxu0 0.0
        %1861 = vmatprep.subr.mxu0 0.0
        %1862 = vmatpush2.msra.mxu0 0.0
        %1863 = vmatprep.mubr.f32.mxu0 0.0
        %1864 = vmatmul.mubr.f32.gmra.mxu0 %v1797
        %v1865 = vpop.f32.mrf.mxu0
        %v1866 = vadd.f32 0.0, %v1865
        %v1867 = vpop.f32.mrf.mxu0
        %1868 = vdwg.mxu0
        %v1869 = vadd.f32 %v1629, %v1866
        %v1870 = vld [vmem:[%s11] sm:$0x1]
        %v1872 = vlaneseq
        %v1873 = vshrl.u32 %v1872, 7
        %v1874 = vsub.s32 0, %v1873
        %v1875 = vrot.slane %v1870, %v1874
        %v1877 = vadd.f32 %v1869, %v1875
        %v1878 = vadd.f32 %v1877, %v820
        %v1879 = vsel %vm832, %v1878, 0.0
        %1880 = vadd.xlane.f32.xlu0 %v1879
        %v1881 = vpop.xlane.xlu0 %1880
        %v1882 = vrcp.pop 32.0
        %v1883 = vmul.f32 %v1881, %v1882
        %v1884 = vsub.f32 %v1878, %v1883
        %v1885 = vmul.f32 %v1884, %v1884
        %v1886 = vsel %vm832, %v1885, 0.0
        %1887 = vadd.xlane.f32.xlu0 %v1886
        %v1888 = vpop.xlane.xlu0 %1887
        %v1889 = vmul.f32 %v1888, %v1882
        %v1890 = vadd.f32 %v1889, 1e-12
        %v1891 = vrsqrt.pop %v1890
        %v1892 = vmul.f32 %v1884, %v1891
        %v1893 = vld [vmem:[%s12] sm:$0x1]
        %v1895 = vlaneseq
        %v1896 = vshrl.u32 %v1895, 7
        %v1897 = vsub.s32 0, %v1896
        %v1898 = vrot.slane %v1893, %v1897
        %v1900 = vmul.f32 %v1898, %v1892
        %v1901 = vld [vmem:[%s13] sm:$0x1]
        %v1903 = vlaneseq
        %v1904 = vshrl.u32 %v1903, 7
        %v1905 = vsub.s32 0, %v1904
        %v1906 = vrot.slane %v1901, %v1905
        %v1908 = vadd.f32 %v1900, %v1906
        %1909 = vst.msk [vmem:[%s639] sm:$0xff] %vm832, %v1908
        %s1910 = sand.u32 %s374, 1
        %s1911 = scalar_lea.sflag [#allocation6], %s1910
        %s1912 = sand.u32 %s374, 1
        %s1913 = smul.addr %s1912, 8
        %s1914 = scalar_lea.vmem [#allocation16], %s1913
        // Predicated region
        $region109: #{tpu_custom_call.1} parent=75 // pred_check
          %p1915 = pneg %p384
        $region110: #{tpu_custom_call.1} parent=75 // pred_check_branch
          %1917 = sbr.rel (%p1915) target = $region112
        $region111: #{tpu_custom_call.1} parent=75 // pred_region
          %s1919 = ssub.s32 128, 128
          %1920 = vsyncadd %s1911, %s1919
          %s1921 = sadd.s32 %s41, %s40
          %s1922 = smul.addr %s1921, 128
          %s1923 = scalar_lea.hbm %s14, %s1922
          %s1925 = sshll.u32 %s1914, 4
          %s1926 = int_to_ptr.vmem [resolvable:$true] %s1925
          %1928 = dma.vmem_to_hbm [thread:$0]  %s1926, 128, %s1923, %s1911
        $region112: #{tpu_custom_call.1} parent=75 // pred_fallthru
          _
      $region76: #{tpu_custom_call.1} parent=5 // pred_fallthru
        _
      %p1929 = scmp.le.s32.totalorder 2, %s31
      // Predicated region
      $region113: #{tpu_custom_call.1} parent=5 // pred_check
        %p1930 = pneg %p1929
      $region114: #{tpu_custom_call.1} parent=5 // pred_check_branch
        %1932 = sbr.rel (%p1930) target = $region116
      $region115: #{tpu_custom_call.1} parent=5 // pred_region
        %s1933 = ssub.s32 %s31, 2
        // Predicated region
        $region117: #{tpu_custom_call.1} parent=115 // pred_check
          %p1934 = pneg %p390
        $region118: #{tpu_custom_call.1} parent=115 // pred_check_branch
          %1936 = sbr.rel (%p1934) target = $region120
        $region119: #{tpu_custom_call.1} parent=115 // pred_region
          %s1937 = sand.u32 %s375, 1
          %s1938 = scalar_lea.sflag [#allocation6], %s1937
          %s1939 = sand.u32 %s375, 1
          %s1940 = smul.addr %s1939, 8
          %s1941 = scalar_lea.vmem [#allocation16], %s1940
          %1942 = dma.done %s1938, 128
        $region120: #{tpu_custom_call.1} parent=115 // pred_fallthru
          _
      $region116: #{tpu_custom_call.1} parent=5 // pred_fallthru
        _
    $region6: #{tpu_custom_call.1} parent=1 // loop_footer
      %s35 = sadd.s32 1, %s31
    $region7: #{tpu_custom_call.1} parent=1 // loop_footer_branch
      %30 = sbr.rel target = $region3
    $region8: #{tpu_custom_call.1} parent=1 // loop_exit
      _
    %1943 = vsyncpa [#allocation5], 1
    %s1944 = scalar_lea.sflag [#allocation5], 1
    %1945 = vsyncpa %s1944, 1
    %1946 = vsyncpa [#allocation8], 1
    %s1947 = scalar_lea.sflag [#allocation8], 1
    %1948 = vsyncpa %s1947, 1
    %1949 = vsyncpa [#allocation11], 1
    %1950 = vsyncpa [#allocation14], 1
    %1951 = vsyncpa [#allocation6], 1
    %s1952 = scalar_lea.sflag [#allocation6], 1
    %1953 = vsyncpa %s1952, 1

</llo_original>
